<compile_context>
chip_gen: v5e
topology: v5e:2x2
jax: 0.10.0
libtpu: 0.0.40
codegen_flags: <defaults>
</compile_context>

<pallas_src>
import jax
import jax.numpy as jnp
from jax.experimental import pallas as pl
from jax.experimental.pallas import tpu as pltpu


# ----------------------------- fused Pallas kernel ---------------------------

def _sk_unit_kernel(x_ref,
                    bd1_ref, b1_ref,
                    tA_ref, bb0_ref, bb1a_ref,
                    tB_ref, bb1b_ref,
                    watt_ref, batt_ref,
                    wl_ref, bl_ref,
                    o_ref):
    """Whole SKUnit forward for a block of Bblk batch elements.

    Layout: every activation is a lane-dense 2-D slab (Bblk*H, W*C).

    x_ref    : (Bblk, H, W*Cin) bf16 input slab
    bd1      : (W*Cin, W*mid)   bf16 block-diag 1x1 conv (+folded BN)
    tA       : (W*mid, 6*W*mid) bf16 Toeplitz taps [br0 k0..k2 | br1a k0..k2]
    tB       : (W*mid, 3*W*mid) bf16 Toeplitz taps of branch1's 2nd conv
    b*       : (1, W*C) f32 lane-dense bias rows (BN folded)
    watt/batt: folded GAP->fc->(fcs0-fcs1) attention matmul (closed-form M=2)
    wl/bl    : (2*W*mid, W*Cout) fused [final 1x1 ; shortcut 1x1] weights/bias
    o_ref    : (Bblk, H, W*Cout) f32 output slab
    """
    Bblk, H, wcin = x_ref.shape
    HB = Bblk * H
    wc = b1_ref.shape[1]          # W * mid
    wcout = o_ref.shape[2]        # W * Cout

    xb = x_ref[...].reshape(HB, wcin)                               # bf16

    # ---- 1x1 conv (Cin -> mid) + folded BN: one block-diagonal matmul -------
    h1 = jnp.dot(xb, bd1_ref[...],
                 preferred_element_type=jnp.float32) + b1_ref[...]  # (HB, wc)

    # Height-halo masks (SAME padding along W is folded into the Toeplitz
    # matrices).  local row = global row % H, so per-image boundaries inside a
    # stacked batch block are handled correctly.
    row = jax.lax.broadcasted_iota(jnp.int32, (HB, wc), 0) % H
    not_top = row >= 1
    not_bot = row <= H - 2

    def taps_to_conv(m0, m1, m2, b_ref):
        # y[h] = m0[h-1] + m1[h] + m2[h+1] with zero halo (rows masked out).
        acc = m1
        acc = acc + jnp.where(not_top, pltpu.roll(m0, shift=1, axis=0), 0.0)
        acc = acc + jnp.where(not_bot, pltpu.roll(m2, shift=HB - 1, axis=0), 0.0)
        return jnp.maximum(acc + b_ref[...], 0.0)

    # ---- SKConv branches: 3 convs in 2 MXU matmuls (taps concatenated on N) -
    h1b = h1.astype(jnp.bfloat16)
    mA = jnp.dot(h1b, tA_ref[...], preferred_element_type=jnp.float32)
    br0 = taps_to_conv(mA[:, 0 * wc:1 * wc], mA[:, 1 * wc:2 * wc],
                       mA[:, 2 * wc:3 * wc], bb0_ref)
    br1m = taps_to_conv(mA[:, 3 * wc:4 * wc], mA[:, 4 * wc:5 * wc],
                        mA[:, 5 * wc:6 * wc], bb1a_ref)
    mB = jnp.dot(br1m.astype(jnp.bfloat16), tB_ref[...],
                 preferred_element_type=jnp.float32)
    br1 = taps_to_conv(mB[:, 0 * wc:1 * wc], mB[:, 1 * wc:2 * wc],
                       mB[:, 2 * wc:3 * wc], bb1b_ref)

    # ---- selective-kernel attention (M=2 closed form, fused FCs) ------------
    feaU = (br0 + br1).reshape(Bblk, H, wc)
    rowsum = jnp.sum(feaU, axis=1)                                  # (Bblk, wc)
    dlog = jnp.dot(rowsum, watt_ref[...],
                   preferred_element_type=jnp.float32) + batt_ref[...]
    att0 = 1.0 / (1.0 + jnp.exp(-dlog))      # softmax over M=2 == sigmoid
    sk = (br1.reshape(Bblk, H, wc)
          + (br0 - br1).reshape(Bblk, H, wc) * att0[:, None, :]).reshape(HB, wc)

    # ---- final 1x1 (+folded BNs) + shortcut 1x1 (+BN) fused: one K=2*wc pass
    lhs = jnp.concatenate([sk.astype(jnp.bfloat16), xb], axis=1)    # (HB, 2*wc)
    out = jnp.dot(lhs, wl_ref[...],
                  preferred_element_type=jnp.float32) + bl_ref[...]
    o_ref[...] = out.reshape(Bblk, H, wcout)


# ------------------------------ wrapper ---------------------------------------

_W_ARG_ORDER = ("bd1", "b1", "tA", "bb0", "bb1a", "tB", "bb1b",
                "watt", "batt", "wlast", "blast")


def _const_index_map(ndim):
    return lambda b: (0,) * ndim


def _default_bblk(B):
    # Stack everything when B is tiny (maximize MXU row fill, one grid step);
    # for larger even B keep >= 2 parallel grid steps (v7x has 2 TensorCores).
    if B <= 2 or B % 2 != 0:
        return B
    return B // 2


def sk_unit_forward(x_nchw, kparams, bblk=None):
    """SKUnit forward. x_nchw: (B, Cin, H, W) f32 -> (B, Cout, H, W) f32."""
    B, Cin, H, W = x_nchw.shape
    if bblk is None:
        bblk = _default_bblk(B)
    assert B % bblk == 0, "batch must be divisible by the per-step batch block"
    wc_out = kparams["wlast"].shape[1]
    cout = wc_out // W

    # NCHW -> lane-dense (B, H, W*Cin) bf16 slab (one fused XLA transpose+cast).
    # Feeding NHWC activations directly would make this a free reshape.
    x2 = jnp.transpose(x_nchw, (0, 2, 3, 1)).reshape(B, H, W * Cin)
    x2 = x2.astype(jnp.bfloat16)

    wargs = tuple(kparams[k] for k in _W_ARG_ORDER)
    in_specs = [pl.BlockSpec((bblk, H, W * Cin), lambda b: (b, 0, 0))]
    in_specs += [pl.BlockSpec(a.shape, _const_index_map(a.ndim)) for a in wargs]

    out2 = pl.pallas_call(
        _sk_unit_kernel,
        out_shape=jax.ShapeDtypeStruct((B, H, wc_out), jnp.float32),
        grid=(B // bblk,),
        in_specs=in_specs,
        out_specs=pl.BlockSpec((bblk, H, wc_out), lambda b: (b, 0, 0)),
        compiler_params=pltpu.CompilerParams(
            dimension_semantics=("parallel",)),
    )(x2, *wargs)

    return jnp.transpose(out2.reshape(B, H, W, cout), (0, 3, 1, 2))


# --------------------------- parameter preprocessing ---------------------------

def build_kernel_params(p, H, W):
    """Fold layout transforms + op fusions into the weights (done once, offline)."""
    f32, bf16 = jnp.float32, jnp.bfloat16
    eye_w = jnp.eye(W, dtype=f32)

    def block_diag(w):                     # 1x1 conv -> (W*Cin, W*Cout)
        return jnp.kron(eye_w, w)

    def toeplitz_taps(we):                 # 3x3 SAME conv -> [3 x (W*Cin, W*Cout)]
        mats = []
        for ky in range(3):
            t = jnp.zeros((W * we.shape[2], W * we.shape[3]), f32)
            for kx in range(3):
                t = t + jnp.kron(jnp.eye(W, W, k=1 - kx, dtype=f32), we[ky, kx])
            mats.append(t)
        return mats

    def bias_row(b):                       # (C,) -> (1, W*C) lane-dense
        return jnp.tile(b, W).reshape(1, -1)

    # Attention: fold GAP scale + fc + (fcs0 - fcs1) into one matmul.
    # Valid because the reference has no nonlinearity between fc and fcs.
    wfc_k = jnp.tile(p["wfc"], (W, 1)) / float(H * W)          # (W*mid, d)
    wdiff = p["wfcs"][0] - p["wfcs"][1]                        # (d, mid)
    watt = jnp.tile(wdiff, (1, W))                             # (d, W*mid)
    wfold = wfc_k @ watt                                       # (W*mid, W*mid)
    bfold = (p["bfc"].reshape(1, -1) @ watt
             + jnp.tile(p["bfcs"][0] - p["bfcs"][1], W).reshape(1, -1))

    # Final 1x1 + shortcut 1x1 fused along K: lhs in kernel is [sk | x].
    wlast = jnp.concatenate([block_diag(p["w_final"]),
                             block_diag(p["wsc"])], axis=0)
    blast = bias_row(p["b_final"]) + bias_row(p["bsc"])

    # Toeplitz taps: branch0 and branch1's first conv share the LHS -> concat.
    tA = jnp.concatenate(toeplitz_taps(p["wb0"]) + toeplitz_taps(p["wb1a"]),
                         axis=1)                               # (W*mid, 6*W*mid)
    tB = jnp.concatenate(toeplitz_taps(p["wb1b"]), axis=1)     # (W*mid, 3*W*mid)

    return dict(
        bd1=block_diag(p["w1"]).astype(bf16),
        b1=bias_row(p["b1"]),
        tA=tA.astype(bf16),
        bb0=bias_row(p["bb0"]),
        bb1a=bias_row(p["bb1a"]),
        tB=tB.astype(bf16),
        bb1b=bias_row(p["bb1b"]),
        watt=wfold.astype(f32),
        batt=bfold.astype(f32),
        wlast=wlast.astype(bf16),
        blast=blast,
    )


def fold_conv_bn(key, cin, cout, ksize):
    """Conv(ksize) + BatchNorm (inference) folded into (w_eff, b_eff)."""
    ks = jax.random.split(key, 6)
    w = 0.1 * jax.random.normal(ks[0], (ksize, ksize, cin, cout), jnp.float32)
    b = 0.1 * jax.random.normal(ks[1], (cout,), jnp.float32)
    gamma = 1.0 + 0.1 * jax.random.normal(ks[2], (cout,), jnp.float32)
    beta = 0.1 * jax.random.normal(ks[3], (cout,), jnp.float32)
    mean = 0.1 * jax.random.normal(ks[4], (cout,), jnp.float32)
    var = 0.9 + 0.2 * jax.random.uniform(ks[5], (cout,), jnp.float32)
    s = gamma / jnp.sqrt(var + 1e-5)
    w_eff = w * s
    b_eff = (b - mean) * s + beta
    if ksize == 1:
        w_eff = w_eff.reshape(cin, cout)
    return w_eff, b_eff


def bn_affine(key, c):
    """Stand-alone BatchNorm (inference) as per-channel scale/shift."""
    ks = jax.random.split(key, 4)
    gamma = 1.0 + 0.1 * jax.random.normal(ks[0], (c,), jnp.float32)
    beta = 0.1 * jax.random.normal(ks[1], (c,), jnp.float32)
    mean = 0.1 * jax.random.normal(ks[2], (c,), jnp.float32)
    var = 0.9 + 0.2 * jax.random.uniform(ks[3], (c,), jnp.float32)
    s = gamma / jnp.sqrt(var + 1e-5)
    t = beta - mean * s
    return s, t


# ------------------------------ pure-JAX reference -----------------------------

def ref_forward(x_nhwc, p, M):
    def conv3(x, w, b):
        y = jax.lax.conv_general_dilated(
            x, w, (1, 1), "SAME", dimension_numbers=("NHWC", "HWIO", "NHWC"))
        return jnp.maximum(y + b, 0.0)

    def conv1(x, w, b):
        return jnp.einsum("bhwc,co->bhwo", x, w) + b

    h1 = conv1(x_nhwc, p["w1"], p["b1"])
    br0 = conv3(h1, p["wb0"], p["bb0"])
    br1 = conv3(conv3(h1, p["wb1a"], p["bb1a"]), p["wb1b"], p["bb1b"])
    feas = jnp.stack([br0, br1], axis=0)
    fea_U = feas.sum(0)
    fea_s = fea_U.mean(axis=(1, 2))
    z = fea_s @ p["wfc"] + p["bfc"]
    logits = jnp.stack([z @ p["wfcs"][m] + p["bfcs"][m] for m in range(M)], 0)
    att = jax.nn.softmax(logits, axis=0)
    sk = (feas * att[:, :, None, None, :]).sum(0)
    out = conv1(sk, p["w_final"], p["b_final"])
    sc = conv1(x_nhwc, p["wsc"], p["bsc"])
    return out + sc


# --------------------------------- main -----------------------------------------

if __name__ == "__main__":
    # SKUnit(in_features=8, out_features=16, M=2, G=1, r=2, stride=1, L=4)
    B, Cin, H, W = 2, 8, 16, 16
    Cout = 16
    M, G, r, L = 2, 1, 2, 4           # kernel specialised to M=2, G=1, stride=1
    mid = Cout // 2                   # 8
    d = max(mid // r, L)              # 4
    assert M == 2 and G == 1, "fused kernel assumes M=2, G=1, stride=1"

    key = jax.random.PRNGKey(0)
    keys = jax.random.split(key, 13)

    w1, b1 = fold_conv_bn(keys[0], Cin, mid, 1)            # conv1x1(in->mid)+BN
    wb0, bb0 = fold_conv_bn(keys[1], mid, mid, 3)          # branch 0
    wb1a, bb1a = fold_conv_bn(keys[2], mid, mid, 3)        # branch 1 (two convs)
    wb1b, bb1b = fold_conv_bn(keys[3], mid, mid, 3)
    wfc = 0.1 * jax.random.normal(keys[4], (mid, d), jnp.float32)
    bfc = 0.1 * jax.random.normal(keys[5], (d,), jnp.float32)
    wfcs = 0.1 * jax.random.normal(keys[6], (M, d, mid), jnp.float32)
    bfcs = 0.1 * jax.random.normal(keys[7], (M, mid), jnp.float32)
    s3, t3 = bn_affine(keys[8], mid)                       # BN after SKConv
    w5, b5 = fold_conv_bn(keys[9], mid, Cout, 1)           # conv1x1(mid->out)+BN
    w_final = s3[:, None] * w5                             # fold post-SK BN in
    b_final = t3 @ w5 + b5
    wsc, bsc = fold_conv_bn(keys[10], Cin, Cout, 1)        # shortcut conv1x1+BN

    params = dict(w1=w1, b1=b1, wb0=wb0, bb0=bb0, wb1a=wb1a, bb1a=bb1a,
                  wb1b=wb1b, bb1b=bb1b, wfc=wfc, bfc=bfc, wfcs=wfcs, bfcs=bfcs,
                  w_final=w_final, b_final=b_final, wsc=wsc, bsc=bsc)

    kparams = build_kernel_params(params, H, W)

    @jax.jit
    def fwd(x_nchw):
        return sk_unit_forward(x_nchw, kparams)

    x = jax.random.normal(jax.random.PRNGKey(0), (B, Cin, H, W), jnp.float32)

    out = jax.block_until_ready(fwd(x))

    # correctness check against a plain-JAX reference (f32, original weights)
    ref = ref_forward(jnp.transpose(x, (0, 2, 3, 1)), params, M)
    ref = jnp.transpose(ref, (0, 3, 1, 2))
    assert out.shape == (B, Cout, H, W)
    assert jnp.allclose(out, ref, rtol=2e-2, atol=2e-2), "mismatch vs reference"

    # TODO(synk): training-mode BatchNorm (batch statistics) is not implemented;
    # BN is folded in inference mode, matching the deterministic spec above.
    print("KERNEL_OK")
</pallas_src>

<mosaic_0001>
module attributes {stable_mosaic.version = 11 : i64} {
  func.func @_sk_unit_kernel(%arg0: i32, %arg1: memref<2x16x128xbf16, #tpu.memory_space<vmem>>, %arg2: memref<128x128xbf16, #tpu.memory_space<vmem>>, %arg3: memref<1x128xf32, #tpu.memory_space<vmem>>, %arg4: memref<128x768xbf16, #tpu.memory_space<vmem>>, %arg5: memref<1x128xf32, #tpu.memory_space<vmem>>, %arg6: memref<1x128xf32, #tpu.memory_space<vmem>>, %arg7: memref<128x384xbf16, #tpu.memory_space<vmem>>, %arg8: memref<1x128xf32, #tpu.memory_space<vmem>>, %arg9: memref<128x128xf32, #tpu.memory_space<vmem>>, %arg10: memref<1x128xf32, #tpu.memory_space<vmem>>, %arg11: memref<256x256xbf16, #tpu.memory_space<vmem>>, %arg12: memref<1x256xf32, #tpu.memory_space<vmem>>, %arg13: memref<2x16x256xf32, #tpu.memory_space<vmem>>) attributes {dimension_semantics = [#tpu.dimension_semantics<parallel>], iteration_bounds = array<i64: 1>, scalar_prefetch = 0 : i64, scratch_operands = 0 : i64, tpu.core_type = #tpu.core_type<tc>, window_params = [{transform_indices = @transform_0, window_bounds = array<i64: 2, 16, 128>}, {pipeline_mode = #tpu.pipeline_mode<synchronous>, transform_indices = @transform_1, window_bounds = array<i64: 128, 128>}, {pipeline_mode = #tpu.pipeline_mode<synchronous>, transform_indices = @transform_2, window_bounds = array<i64: 1, 128>}, {pipeline_mode = #tpu.pipeline_mode<synchronous>, transform_indices = @transform_3, window_bounds = array<i64: 128, 768>}, {pipeline_mode = #tpu.pipeline_mode<synchronous>, transform_indices = @transform_4, window_bounds = array<i64: 1, 128>}, {pipeline_mode = #tpu.pipeline_mode<synchronous>, transform_indices = @transform_5, window_bounds = array<i64: 1, 128>}, {pipeline_mode = #tpu.pipeline_mode<synchronous>, transform_indices = @transform_6, window_bounds = array<i64: 128, 384>}, {pipeline_mode = #tpu.pipeline_mode<synchronous>, transform_indices = @transform_7, window_bounds = array<i64: 1, 128>}, {pipeline_mode = #tpu.pipeline_mode<synchronous>, transform_indices = @transform_8, window_bounds = array<i64: 128, 128>}, {pipeline_mode = #tpu.pipeline_mode<synchronous>, transform_indices = @transform_9, window_bounds = array<i64: 1, 128>}, {pipeline_mode = #tpu.pipeline_mode<synchronous>, transform_indices = @transform_10, window_bounds = array<i64: 256, 256>}, {pipeline_mode = #tpu.pipeline_mode<synchronous>, transform_indices = @transform_11, window_bounds = array<i64: 1, 256>}, {transform_indices = @transform_12, window_bounds = array<i64: 2, 16, 256>}]} {
    %c0 = arith.constant 0 : index
    %c0_0 = arith.constant 0 : index
    %c0_1 = arith.constant 0 : index
    %0 = vector.load %arg1[%c0, %c0_0, %c0_1] : memref<2x16x128xbf16, #tpu.memory_space<vmem>>, vector<2x16x128xbf16>
    %1 = vector.shape_cast %0 : vector<2x16x128xbf16> to vector<32x128xbf16>
    %c0_2 = arith.constant 0 : index
    %c0_3 = arith.constant 0 : index
    %2 = vector.load %arg2[%c0_2, %c0_3] : memref<128x128xbf16, #tpu.memory_space<vmem>>, vector<128x128xbf16>
    %cst = arith.constant dense<0.000000e+00> : vector<32x128xf32>
    %3 = tpu.matmul %1, %2, %cst {dimension_numbers = #tpu.dot_dimension_numbers<[1], [0], [0], [1], [0, 0, 1, 1], [], []>} : vector<32x128xbf16>, vector<128x128xbf16>, vector<32x128xf32> -> vector<32x128xf32>
    %c0_4 = arith.constant 0 : index
    %c0_5 = arith.constant 0 : index
    %4 = vector.load %arg3[%c0_4, %c0_5] : memref<1x128xf32, #tpu.memory_space<vmem>>, vector<1x128xf32>
    %5 = vector.broadcast %4 : vector<1x128xf32> to vector<32x128xf32>
    %6 = arith.addf %3, %5 : vector<32x128xf32>
    %7 = tpu.iota {dimensions = array<i32: 0>} : vector<32x128xi32>
    %c16_i32 = arith.constant 16 : i32
    %c0_i32 = arith.constant 0 : i32
    %8 = arith.cmpi eq, %c16_i32, %c0_i32 : i32
    %c1_i32 = arith.constant 1 : i32
    %9 = arith.select %8, %c1_i32, %c16_i32 : i32
    %10 = vector.broadcast %9 : i32 to vector<32x128xi32>
    %11 = arith.remsi %7, %10 : vector<32x128xi32>
    %c0_i32_6 = arith.constant 0 : i32
    %12 = vector.broadcast %c0_i32_6 : i32 to vector<32x128xi32>
    %13 = arith.cmpi ne, %11, %12 : vector<32x128xi32>
    %c0_i32_7 = arith.constant 0 : i32
    %14 = vector.broadcast %c0_i32_7 : i32 to vector<32x128xi32>
    %15 = arith.cmpi slt, %11, %14 : vector<32x128xi32>
    %c0_i32_8 = arith.constant 0 : i32
    %16 = arith.cmpi slt, %9, %c0_i32_8 : i32
    %17 = vector.broadcast %16 : i1 to vector<32x128xi1>
    %18 = vector.broadcast %17 : vector<32x128xi1> to vector<32x128xi1>
    %19 = arith.xori %15, %18 : vector<32x128xi1>
    %20 = arith.andi %19, %13 : vector<32x128xi1>
    %21 = vector.broadcast %9 : i32 to vector<32x128xi32>
    %22 = arith.addi %11, %21 : vector<32x128xi32>
    %23 = arith.select %20, %22, %11 : vector<32x128xi1>, vector<32x128xi32>
    %c1_i32_9 = arith.constant 1 : i32
    %24 = vector.broadcast %c1_i32_9 : i32 to vector<32x128xi32>
    %25 = arith.cmpi sge, %23, %24 : vector<32x128xi32>
    %c14_i32 = arith.constant 14 : i32
    %26 = vector.broadcast %c14_i32 : i32 to vector<32x128xi32>
    %27 = arith.cmpi sle, %23, %26 : vector<32x128xi32>
    %28 = arith.truncf %6 : vector<32x128xf32> to vector<32x128xbf16>
    %c0_10 = arith.constant 0 : index
    %c0_11 = arith.constant 0 : index
    %29 = vector.load %arg4[%c0_10, %c0_11] : memref<128x768xbf16, #tpu.memory_space<vmem>>, vector<128x768xbf16>
    %cst_12 = arith.constant dense<0.000000e+00> : vector<32x768xf32>
    %30 = tpu.matmul %28, %29, %cst_12 {dimension_numbers = #tpu.dot_dimension_numbers<[1], [0], [0], [1], [0, 0, 1, 1], [], []>} : vector<32x128xbf16>, vector<128x768xbf16>, vector<32x768xf32> -> vector<32x768xf32>
    %31 = vector.extract_strided_slice %30 {offsets = [0, 0], sizes = [32, 128], strides = [1, 1]} : vector<32x768xf32> to vector<32x128xf32>
    %32 = vector.extract_strided_slice %30 {offsets = [0, 128], sizes = [32, 128], strides = [1, 1]} : vector<32x768xf32> to vector<32x128xf32>
    %33 = vector.extract_strided_slice %30 {offsets = [0, 256], sizes = [32, 128], strides = [1, 1]} : vector<32x768xf32> to vector<32x128xf32>
    %c1_i32_13 = arith.constant 1 : i32
    %34 = tpu.dynamic_rotate %31 by %c1_i32_13 dim 0 : vector<32x128xf32>, i32 -> vector<32x128xf32>
    %cst_14 = arith.constant 0.000000e+00 : f32
    %35 = vector.broadcast %cst_14 : f32 to vector<32x128xf32>
    %36 = arith.select %25, %34, %35 : vector<32x128xi1>, vector<32x128xf32>
    %37 = arith.addf %32, %36 : vector<32x128xf32>
    %c31_i32 = arith.constant 31 : i32
    %38 = tpu.dynamic_rotate %33 by %c31_i32 dim 0 : vector<32x128xf32>, i32 -> vector<32x128xf32>
    %cst_15 = arith.constant 0.000000e+00 : f32
    %39 = vector.broadcast %cst_15 : f32 to vector<32x128xf32>
    %40 = arith.select %27, %38, %39 : vector<32x128xi1>, vector<32x128xf32>
    %41 = arith.addf %37, %40 : vector<32x128xf32>
    %c0_16 = arith.constant 0 : index
    %c0_17 = arith.constant 0 : index
    %42 = vector.load %arg5[%c0_16, %c0_17] : memref<1x128xf32, #tpu.memory_space<vmem>>, vector<1x128xf32>
    %43 = vector.broadcast %42 : vector<1x128xf32> to vector<32x128xf32>
    %44 = arith.addf %41, %43 : vector<32x128xf32>
    %cst_18 = arith.constant 0.000000e+00 : f32
    %45 = vector.broadcast %cst_18 : f32 to vector<32x128xf32>
    %46 = arith.maximumf %44, %45 : vector<32x128xf32>
    %47 = vector.extract_strided_slice %30 {offsets = [0, 384], sizes = [32, 128], strides = [1, 1]} : vector<32x768xf32> to vector<32x128xf32>
    %48 = vector.extract_strided_slice %30 {offsets = [0, 512], sizes = [32, 128], strides = [1, 1]} : vector<32x768xf32> to vector<32x128xf32>
    %49 = vector.extract_strided_slice %30 {offsets = [0, 640], sizes = [32, 128], strides = [1, 1]} : vector<32x768xf32> to vector<32x128xf32>
    %c1_i32_19 = arith.constant 1 : i32
    %50 = tpu.dynamic_rotate %47 by %c1_i32_19 dim 0 : vector<32x128xf32>, i32 -> vector<32x128xf32>
    %cst_20 = arith.constant 0.000000e+00 : f32
    %51 = vector.broadcast %cst_20 : f32 to vector<32x128xf32>
    %52 = arith.select %25, %50, %51 : vector<32x128xi1>, vector<32x128xf32>
    %53 = arith.addf %48, %52 : vector<32x128xf32>
    %c31_i32_21 = arith.constant 31 : i32
    %54 = tpu.dynamic_rotate %49 by %c31_i32_21 dim 0 : vector<32x128xf32>, i32 -> vector<32x128xf32>
    %cst_22 = arith.constant 0.000000e+00 : f32
    %55 = vector.broadcast %cst_22 : f32 to vector<32x128xf32>
    %56 = arith.select %27, %54, %55 : vector<32x128xi1>, vector<32x128xf32>
    %57 = arith.addf %53, %56 : vector<32x128xf32>
    %c0_23 = arith.constant 0 : index
    %c0_24 = arith.constant 0 : index
    %58 = vector.load %arg6[%c0_23, %c0_24] : memref<1x128xf32, #tpu.memory_space<vmem>>, vector<1x128xf32>
    %59 = vector.broadcast %58 : vector<1x128xf32> to vector<32x128xf32>
    %60 = arith.addf %57, %59 : vector<32x128xf32>
    %cst_25 = arith.constant 0.000000e+00 : f32
    %61 = vector.broadcast %cst_25 : f32 to vector<32x128xf32>
    %62 = arith.maximumf %60, %61 : vector<32x128xf32>
    %63 = arith.truncf %62 : vector<32x128xf32> to vector<32x128xbf16>
    %c0_26 = arith.constant 0 : index
    %c0_27 = arith.constant 0 : index
    %64 = vector.load %arg7[%c0_26, %c0_27] : memref<128x384xbf16, #tpu.memory_space<vmem>>, vector<128x384xbf16>
    %cst_28 = arith.constant dense<0.000000e+00> : vector<32x384xf32>
    %65 = tpu.matmul %63, %64, %cst_28 {dimension_numbers = #tpu.dot_dimension_numbers<[1], [0], [0], [1], [0, 0, 1, 1], [], []>} : vector<32x128xbf16>, vector<128x384xbf16>, vector<32x384xf32> -> vector<32x384xf32>
    %66 = vector.extract_strided_slice %65 {offsets = [0, 0], sizes = [32, 128], strides = [1, 1]} : vector<32x384xf32> to vector<32x128xf32>
    %67 = vector.extract_strided_slice %65 {offsets = [0, 128], sizes = [32, 128], strides = [1, 1]} : vector<32x384xf32> to vector<32x128xf32>
    %68 = vector.extract_strided_slice %65 {offsets = [0, 256], sizes = [32, 128], strides = [1, 1]} : vector<32x384xf32> to vector<32x128xf32>
    %c1_i32_29 = arith.constant 1 : i32
    %69 = tpu.dynamic_rotate %66 by %c1_i32_29 dim 0 : vector<32x128xf32>, i32 -> vector<32x128xf32>
    %cst_30 = arith.constant 0.000000e+00 : f32
    %70 = vector.broadcast %cst_30 : f32 to vector<32x128xf32>
    %71 = arith.select %25, %69, %70 : vector<32x128xi1>, vector<32x128xf32>
    %72 = arith.addf %67, %71 : vector<32x128xf32>
    %c31_i32_31 = arith.constant 31 : i32
    %73 = tpu.dynamic_rotate %68 by %c31_i32_31 dim 0 : vector<32x128xf32>, i32 -> vector<32x128xf32>
    %cst_32 = arith.constant 0.000000e+00 : f32
    %74 = vector.broadcast %cst_32 : f32 to vector<32x128xf32>
    %75 = arith.select %27, %73, %74 : vector<32x128xi1>, vector<32x128xf32>
    %76 = arith.addf %72, %75 : vector<32x128xf32>
    %c0_33 = arith.constant 0 : index
    %c0_34 = arith.constant 0 : index
    %77 = vector.load %arg8[%c0_33, %c0_34] : memref<1x128xf32, #tpu.memory_space<vmem>>, vector<1x128xf32>
    %78 = vector.broadcast %77 : vector<1x128xf32> to vector<32x128xf32>
    %79 = arith.addf %76, %78 : vector<32x128xf32>
    %cst_35 = arith.constant 0.000000e+00 : f32
    %80 = vector.broadcast %cst_35 : f32 to vector<32x128xf32>
    %81 = arith.maximumf %79, %80 : vector<32x128xf32>
    %82 = arith.addf %46, %81 : vector<32x128xf32>
    %83 = vector.shape_cast %82 : vector<32x128xf32> to vector<2x16x128xf32>
    %cst_36 = arith.constant dense<0.000000e+00> : vector<2x128xf32>
    %84 = vector.multi_reduction <add>, %83, %cst_36 [1] : vector<2x16x128xf32> to vector<2x128xf32>
    %c0_37 = arith.constant 0 : index
    %c0_38 = arith.constant 0 : index
    %85 = vector.load %arg9[%c0_37, %c0_38] : memref<128x128xf32, #tpu.memory_space<vmem>>, vector<128x128xf32>
    %cst_39 = arith.constant dense<0.000000e+00> : vector<2x128xf32>
    %86 = tpu.matmul %84, %85, %cst_39 {dimension_numbers = #tpu.dot_dimension_numbers<[1], [0], [0], [1], [0, 0, 1, 1], [], []>} : vector<2x128xf32>, vector<128x128xf32>, vector<2x128xf32> -> vector<2x128xf32>
    %c0_40 = arith.constant 0 : index
    %c0_41 = arith.constant 0 : index
    %87 = vector.load %arg10[%c0_40, %c0_41] : memref<1x128xf32, #tpu.memory_space<vmem>>, vector<1x128xf32>
    %88 = vector.broadcast %87 : vector<1x128xf32> to vector<2x128xf32>
    %89 = arith.addf %86, %88 : vector<2x128xf32>
    %cst_42 = arith.constant 0.000000e+00 : f32
    %90 = vector.broadcast %cst_42 : f32 to vector<2x128xf32>
    %91 = arith.subf %90, %89 : vector<2x128xf32>
    %92 = math.exp %91 : vector<2x128xf32>
    %cst_43 = arith.constant 1.000000e+00 : f32
    %93 = vector.broadcast %cst_43 : f32 to vector<2x128xf32>
    %94 = arith.addf %93, %92 : vector<2x128xf32>
    %cst_44 = arith.constant 1.000000e+00 : f32
    %95 = vector.broadcast %cst_44 : f32 to vector<2x128xf32>
    %96 = arith.divf %95, %94 : vector<2x128xf32>
    %97 = vector.shape_cast %81 : vector<32x128xf32> to vector<2x16x128xf32>
    %98 = arith.subf %46, %81 : vector<32x128xf32>
    %99 = vector.shape_cast %98 : vector<32x128xf32> to vector<2x16x128xf32>
    %100 = vector.shape_cast %96 : vector<2x128xf32> to vector<2x1x128xf32>
    %101 = vector.broadcast %100 : vector<2x1x128xf32> to vector<2x16x128xf32>
    %102 = arith.mulf %99, %101 : vector<2x16x128xf32>
    %103 = arith.addf %97, %102 : vector<2x16x128xf32>
    %104 = vector.shape_cast %103 : vector<2x16x128xf32> to vector<32x128xf32>
    %105 = arith.truncf %104 : vector<32x128xf32> to vector<32x128xbf16>
    %106 = tpu.concatenate %105, %1 in 1 : vector<32x128xbf16>, vector<32x128xbf16> -> vector<32x256xbf16>
    %c0_45 = arith.constant 0 : index
    %c0_46 = arith.constant 0 : index
    %107 = vector.load %arg11[%c0_45, %c0_46] : memref<256x256xbf16, #tpu.memory_space<vmem>>, vector<256x256xbf16>
    %cst_47 = arith.constant dense<0.000000e+00> : vector<32x256xf32>
    %108 = tpu.matmul %106, %107, %cst_47 {dimension_numbers = #tpu.dot_dimension_numbers<[1], [0], [0], [1], [0, 0, 1, 1], [], []>} : vector<32x256xbf16>, vector<256x256xbf16>, vector<32x256xf32> -> vector<32x256xf32>
    %c0_48 = arith.constant 0 : index
    %c0_49 = arith.constant 0 : index
    %109 = vector.load %arg12[%c0_48, %c0_49] : memref<1x256xf32, #tpu.memory_space<vmem>>, vector<1x256xf32>
    %110 = vector.broadcast %109 : vector<1x256xf32> to vector<32x256xf32>
    %111 = arith.addf %108, %110 : vector<32x256xf32>
    %112 = vector.shape_cast %111 : vector<32x256xf32> to vector<2x16x256xf32>
    %c0_50 = arith.constant 0 : index
    %c0_51 = arith.constant 0 : index
    %c0_52 = arith.constant 0 : index
    %113 = vector.load %arg13[%c0_50, %c0_51, %c0_52] : memref<2x16x256xf32, #tpu.memory_space<vmem>>, vector<2x16x256xf32>
    tpu.vector_store %arg13[%c0_50, %c0_51, %c0_52], %112 {strides = array<i32>} : memref<2x16x256xf32, #tpu.memory_space<vmem>>, vector<2x16x256xf32>,
    return
  }
  func.func @transform_0(%arg0: i32) -> (i32, i32, i32) {
    %c0_i32 = arith.constant 0 : i32
    %c0_i32_0 = arith.constant 0 : i32
    %c0_i32_1 = arith.constant 0 : i32
    return %arg0, %c0_i32, %c0_i32_0 : i32, i32, i32
  }
  func.func @transform_1(%arg0: i32) -> (i32, i32) {
    %c0_i32 = arith.constant 0 : i32
    %c0_i32_0 = arith.constant 0 : i32
    %c0_i32_1 = arith.constant 0 : i32
    return %c0_i32, %c0_i32_0 : i32, i32
  }
  func.func @transform_2(%arg0: i32) -> (i32, i32) {
    %c0_i32 = arith.constant 0 : i32
    %c0_i32_0 = arith.constant 0 : i32
    %c0_i32_1 = arith.constant 0 : i32
    return %c0_i32, %c0_i32_0 : i32, i32
  }
  func.func @transform_3(%arg0: i32) -> (i32, i32) {
    %c0_i32 = arith.constant 0 : i32
    %c0_i32_0 = arith.constant 0 : i32
    %c0_i32_1 = arith.constant 0 : i32
    return %c0_i32, %c0_i32_0 : i32, i32
  }
  func.func @transform_4(%arg0: i32) -> (i32, i32) {
    %c0_i32 = arith.constant 0 : i32
    %c0_i32_0 = arith.constant 0 : i32
    %c0_i32_1 = arith.constant 0 : i32
    return %c0_i32, %c0_i32_0 : i32, i32
  }
  func.func @transform_5(%arg0: i32) -> (i32, i32) {
    %c0_i32 = arith.constant 0 : i32
    %c0_i32_0 = arith.constant 0 : i32
    %c0_i32_1 = arith.constant 0 : i32
    return %c0_i32, %c0_i32_0 : i32, i32
  }
  func.func @transform_6(%arg0: i32) -> (i32, i32) {
    %c0_i32 = arith.constant 0 : i32
    %c0_i32_0 = arith.constant 0 : i32
    %c0_i32_1 = arith.constant 0 : i32
    return %c0_i32, %c0_i32_0 : i32, i32
  }
  func.func @transform_7(%arg0: i32) -> (i32, i32) {
    %c0_i32 = arith.constant 0 : i32
    %c0_i32_0 = arith.constant 0 : i32
    %c0_i32_1 = arith.constant 0 : i32
    return %c0_i32, %c0_i32_0 : i32, i32
  }
  func.func @transform_8(%arg0: i32) -> (i32, i32) {
    %c0_i32 = arith.constant 0 : i32
    %c0_i32_0 = arith.constant 0 : i32
    %c0_i32_1 = arith.constant 0 : i32
    return %c0_i32, %c0_i32_0 : i32, i32
  }
  func.func @transform_9(%arg0: i32) -> (i32, i32) {
    %c0_i32 = arith.constant 0 : i32
    %c0_i32_0 = arith.constant 0 : i32
    %c0_i32_1 = arith.constant 0 : i32
    return %c0_i32, %c0_i32_0 : i32, i32
  }
  func.func @transform_10(%arg0: i32) -> (i32, i32) {
    %c0_i32 = arith.constant 0 : i32
    %c0_i32_0 = arith.constant 0 : i32
    %c0_i32_1 = arith.constant 0 : i32
    return %c0_i32, %c0_i32_0 : i32, i32
  }
  func.func @transform_11(%arg0: i32) -> (i32, i32) {
    %c0_i32 = arith.constant 0 : i32
    %c0_i32_0 = arith.constant 0 : i32
    %c0_i32_1 = arith.constant 0 : i32
    return %c0_i32, %c0_i32_0 : i32, i32
  }
  func.func @transform_12(%arg0: i32) -> (i32, i32, i32) {
    %c0_i32 = arith.constant 0 : i32
    %c0_i32_0 = arith.constant 0 : i32
    %c0_i32_1 = arith.constant 0 : i32
    return %arg0, %c0_i32, %c0_i32_0 : i32, i32, i32
  }
}

</mosaic_0001>

<llo_original>
// kernel: fwd.1
$region0: #{fwd.1}
  #allocation0 [shape = 'u32[]', space=smem, size = 0x4, offset = 0x4, fixed_abs, tag = 'smem constant byte address 0x4 - core index']
  #allocation1 [shape = 'u32[72,128]{1,0:T(1,128)}', space=vmem, size = 0x9000, scoped, tag = 'internal scratch']
  %s0 = inlined_call_operand.vmem [shape: bf16[2,16,128], index: 0, kind: input, shape index: {}]
  %s1 = inlined_call_operand.hbm [shape: bf16[128,128], index: 1, kind: input, shape index: {}]
  %s2 = inlined_call_operand.vmem [shape: f32[1,128], index: 2, kind: input, shape index: {}]
  %s3 = inlined_call_operand.vmem [shape: bf16[128,768], index: 3, kind: input, shape index: {}]
  %s4 = inlined_call_operand.vmem [shape: f32[1,128], index: 4, kind: input, shape index: {}]
  %s5 = inlined_call_operand.vmem [shape: f32[1,128], index: 5, kind: input, shape index: {}]
  %s6 = inlined_call_operand.hbm [shape: bf16[128,384], index: 6, kind: input, shape index: {}]
  %s7 = inlined_call_operand.vmem [shape: f32[1,128], index: 7, kind: input, shape index: {}]
  %s8 = inlined_call_operand.vmem [shape: f32[128,128], index: 8, kind: input, shape index: {}]
  %s9 = inlined_call_operand.vmem [shape: f32[1,128], index: 9, kind: input, shape index: {}]
  %s10 = inlined_call_operand.vmem [shape: bf16[256,256], index: 10, kind: input, shape index: {}]
  %s11 = inlined_call_operand.vmem [shape: f32[1,256], index: 11, kind: input, shape index: {}]
  %s12 = inlined_call_operand.vmem [shape: f32[2,16,256], index: 12, kind: output, shape index: {}]
  %s13 = sld [smem:[#allocation0]]
  $region66: #{fwd.1} parent=0
    _
  %s15 = ssub.s32 1, %s13
  %s16 = scalar_select 0, %s15, %s13
  $region1: #{fwd.1} parent=0
    #allocation2 [shape = 'u8[32768]{0}', space=vmem, size = 0x8000, scoped, tag = 'input window, operand 1, single buffered']
    #allocation3 [shape = 's32[1]{0}', space=sflag, size = 0x4, scoped, tag = 'scoped memory for fwd.1']
    #allocation4 [shape = 'u8[98304]{0}', space=vmem, size = 0x18000, scoped, tag = 'input window, operand 6, single buffered']
    #allocation5 [shape = 's32[1]{0}', space=sflag, size = 0x4, scoped, tag = 'scoped memory for fwd.1']
    %17 = vsyncpa [#allocation3], 0
    %18 = vsyncpa [#allocation5], 0
    // Predicated region
    $region2: #{fwd.1} parent=1 // pred_check
      _
    $region3: #{fwd.1} parent=1 // pred_check_branch
      %20 = sbr.rel (0) target = $region5
    $region4: #{fwd.1} parent=1 // pred_region
      _
    $region5: #{fwd.1} parent=1 // pred_fallthru
      _
    // Predicated region
    $region6: #{fwd.1} parent=1 // pred_check
      _
    $region7: #{fwd.1} parent=1 // pred_check_branch
      %22 = sbr.rel (0) target = $region9
    $region8: #{fwd.1} parent=1 // pred_region
      %24 = vsyncadd [#allocation3], 0
      %s25 = sshll.u32 %s1, 4
      %s26 = int_to_ptr.hbm [resolvable:$true] %s25
      %s27 = sshll.u32 [#allocation2], 4
      %s28 = int_to_ptr.vmem [resolvable:$true] %s27
      %33 = dma.hbm_to_vmem [thread:$0]  %s26, 1024, %s28, [#allocation3], 64, 64, 4
    $region9: #{fwd.1} parent=1 // pred_fallthru
      _
    // Predicated region
    $region10: #{fwd.1} parent=1 // pred_check
      _
    $region11: #{fwd.1} parent=1 // pred_check_branch
      %35 = sbr.rel (0) target = $region13
    $region12: #{fwd.1} parent=1 // pred_region
      _
    $region13: #{fwd.1} parent=1 // pred_fallthru
      _
    // Predicated region
    $region14: #{fwd.1} parent=1 // pred_check
      _
    $region15: #{fwd.1} parent=1 // pred_check_branch
      %37 = sbr.rel (0) target = $region17
    $region16: #{fwd.1} parent=1 // pred_region
      _
    $region17: #{fwd.1} parent=1 // pred_fallthru
      _
    // Predicated region
    $region18: #{fwd.1} parent=1 // pred_check
      _
    $region19: #{fwd.1} parent=1 // pred_check_branch
      %39 = sbr.rel (0) target = $region21
    $region20: #{fwd.1} parent=1 // pred_region
      _
    $region21: #{fwd.1} parent=1 // pred_fallthru
      _
    // Predicated region
    $region22: #{fwd.1} parent=1 // pred_check
      _
    $region23: #{fwd.1} parent=1 // pred_check_branch
      %41 = sbr.rel (0) target = $region25
    $region24: #{fwd.1} parent=1 // pred_region
      _
    $region25: #{fwd.1} parent=1 // pred_fallthru
      _
    // Predicated region
    $region26: #{fwd.1} parent=1 // pred_check
      _
    $region27: #{fwd.1} parent=1 // pred_check_branch
      %43 = sbr.rel (0) target = $region29
    $region28: #{fwd.1} parent=1 // pred_region
      %45 = vsyncadd [#allocation5], 0
      %s46 = sshll.u32 %s6, 4
      %s47 = int_to_ptr.hbm [resolvable:$true] %s46
      %s48 = sshll.u32 [#allocation4], 4
      %s49 = int_to_ptr.vmem [resolvable:$true] %s48
      %54 = dma.hbm_to_vmem [thread:$0]  %s47, 3072, %s49, [#allocation5], 192, 192, 12
    $region29: #{fwd.1} parent=1 // pred_fallthru
      _
    // Predicated region
    $region30: #{fwd.1} parent=1 // pred_check
      _
    $region31: #{fwd.1} parent=1 // pred_check_branch
      %56 = sbr.rel (0) target = $region33
    $region32: #{fwd.1} parent=1 // pred_region
      _
    $region33: #{fwd.1} parent=1 // pred_fallthru
      _
    // Predicated region
    $region34: #{fwd.1} parent=1 // pred_check
      _
    $region35: #{fwd.1} parent=1 // pred_check_branch
      %58 = sbr.rel (0) target = $region37
    $region36: #{fwd.1} parent=1 // pred_region
      _
    $region37: #{fwd.1} parent=1 // pred_fallthru
      _
    // Predicated region
    $region38: #{fwd.1} parent=1 // pred_check
      _
    $region39: #{fwd.1} parent=1 // pred_check_branch
      %60 = sbr.rel (0) target = $region41
    $region40: #{fwd.1} parent=1 // pred_region
      _
    $region41: #{fwd.1} parent=1 // pred_fallthru
      _
    // Predicated region
    $region42: #{fwd.1} parent=1 // pred_check
      _
    $region43: #{fwd.1} parent=1 // pred_check_branch
      %62 = sbr.rel (0) target = $region45
    $region44: #{fwd.1} parent=1 // pred_region
      _
    $region45: #{fwd.1} parent=1 // pred_fallthru
      _
    // Predicated region
    $region46: #{fwd.1} parent=1 // pred_check
      _
    $region47: #{fwd.1} parent=1 // pred_check_branch
      %64 = sbr.rel (0) target = $region49
    $region48: #{fwd.1} parent=1 // pred_region
      _
    $region49: #{fwd.1} parent=1 // pred_fallthru
      _
    // Predicated region
    $region50: #{fwd.1} parent=1 // pred_check
      _
    $region51: #{fwd.1} parent=1 // pred_check_branch
      %66 = sbr.rel (0) target = $region53
    $region52: #{fwd.1} parent=1 // pred_region
      %68 = dma.done [#allocation3], 1024
    $region53: #{fwd.1} parent=1 // pred_fallthru
      _
    // Predicated region
    $region54: #{fwd.1} parent=1 // pred_check
      _
    $region55: #{fwd.1} parent=1 // pred_check_branch
      %70 = sbr.rel (0) target = $region57
    $region56: #{fwd.1} parent=1 // pred_region
      %72 = dma.done [#allocation5], 3072
    $region57: #{fwd.1} parent=1 // pred_fallthru
      _
    %v73 = vld [vmem:[%s0] sm:$0xf]
    %v74 = vld [vmem:[%s0 + $0x4] sm:$0xf]
    %v75 = vld [vmem:[%s0 + $0x8] sm:$0xf]
    %v76 = vld [vmem:[%s0 + $0xc] sm:$0xf]
    %v77 = vld [vmem:[#allocation2] sm:$0xf]
    %v78 = vld [vmem:[#allocation2 + $0x4] sm:$0xf]
    %v79 = vld [vmem:[#allocation2 + $0x8] sm:$0xf]
    %v80 = vld [vmem:[#allocation2 + $0xc] sm:$0xf]
    %v81 = vld [vmem:[#allocation2 + $0x10] sm:$0xf]
    %v82 = vld [vmem:[#allocation2 + $0x14] sm:$0xf]
    %v83 = vld [vmem:[#allocation2 + $0x18] sm:$0xf]
    %v84 = vld [vmem:[#allocation2 + $0x1c] sm:$0xf]
    %v85 = vld [vmem:[#allocation2 + $0x20] sm:$0xf]
    %v86 = vld [vmem:[#allocation2 + $0x24] sm:$0xf]
    %v87 = vld [vmem:[#allocation2 + $0x28] sm:$0xf]
    %v88 = vld [vmem:[#allocation2 + $0x2c] sm:$0xf]
    %v89 = vld [vmem:[#allocation2 + $0x30] sm:$0xf]
    %v90 = vld [vmem:[#allocation2 + $0x34] sm:$0xf]
    %v91 = vld [vmem:[#allocation2 + $0x38] sm:$0xf]
    %v92 = vld [vmem:[#allocation2 + $0x3c] sm:$0xf]
    %v93 = vld [vmem:[%s2] sm:$0x1]
    %v95 = vperm.slane %v93, 0
    %v101 = vunpack.c.l.b16 %v73
    %v102 = vunpack.c.l.b16 %v74
    %v103 = vunpack.c.l.b16 %v75
    %v104 = vunpack.c.l.b16 %v76
    %v105 = vpack.c.b16 %v102, %v101
    %v106 = vpack.c.b16 %v104, %v103
    %v125 = vunpack.c.l.b16 %v77
    %v126 = vunpack.c.l.b16 %v78
    %v127 = vunpack.c.l.b16 %v79
    %v128 = vunpack.c.l.b16 %v80
    %v129 = vunpack.c.l.b16 %v81
    %v130 = vunpack.c.l.b16 %v82
    %v131 = vunpack.c.l.b16 %v83
    %v132 = vunpack.c.l.b16 %v84
    %v133 = vunpack.c.l.b16 %v85
    %v134 = vunpack.c.l.b16 %v86
    %v135 = vunpack.c.l.b16 %v87
    %v136 = vunpack.c.l.b16 %v88
    %v137 = vunpack.c.l.b16 %v89
    %v138 = vunpack.c.l.b16 %v90
    %v139 = vunpack.c.l.b16 %v91
    %v140 = vunpack.c.l.b16 %v92
    %v141 = vpack.c.b16 %v126, %v125
    %v142 = vpack.c.b16 %v128, %v127
    %v143 = vpack.c.b16 %v130, %v129
    %v144 = vpack.c.b16 %v132, %v131
    %v145 = vpack.c.b16 %v134, %v133
    %v146 = vpack.c.b16 %v136, %v135
    %v147 = vpack.c.b16 %v138, %v137
    %v148 = vpack.c.b16 %v140, %v139
    %157 = vmatpush.bf16.msra.mxu0 %v148
    %158 = vmatpush.bf16.msra.mxu0 %v147
    %159 = vmatpush.bf16.msra.mxu0 %v146
    %160 = vmatpush.bf16.msra.mxu0 %v145
    %161 = vmatpush.bf16.msra.mxu0 %v144
    %162 = vmatpush.bf16.msra.mxu0 %v143
    %163 = vmatpush.bf16.msra.mxu0 %v142
    %164 = vmatpush.bf16.msra.mxu0 %v141
    %165 = vmatmul.bf16.gmra.mxu0 %v105
    %v166 = vpop.f32.mrf.mxu0
    %v167 = vadd.f32 %v95, %v166
    %v168 = vpop.f32.mrf.mxu0
    %v169 = vadd.f32 %v95, %v168
    %170 = vmatmul.bf16.gmra.mxu0 %v106
    %v171 = vpop.f32.mrf.mxu0
    %v172 = vadd.f32 %v95, %v171
    %v173 = vpop.f32.mrf.mxu0
    %v174 = vadd.f32 %v95, %v173
    %175 = vdwg.mxu0
    %v176 = vlaneseq
    %v177 = vshrl.u32 %v176, 7
    %v178 = vadd.s32 %v177, 8
    %v179 = vadd.s32 %v177, 16
    %v180 = vadd.s32 %v177, 24
    %vm181 = vcmp.lt.s32.totalorder %v177, 0
    %v182 = vsub.s32 0, %v177
    %v183 = vsel %vm181, %v182, %v177
    %v184 = vshrl.u32 %v183, 4
    %v185 = vand.u32 %v183, 15
    %v186 = vsub.s32 0, %v185
    %v187 = vsel %vm181, %v186, %v185
    %vm188 = vcmp.lt.s32.totalorder %v178, 0
    %v189 = vsub.s32 0, %v178
    %v190 = vsel %vm188, %v189, %v178
    %v191 = vshrl.u32 %v190, 4
    %v192 = vand.u32 %v190, 15
    %v193 = vsub.s32 0, %v192
    %v194 = vsel %vm188, %v193, %v192
    %vm195 = vcmp.lt.s32.totalorder %v179, 0
    %v196 = vsub.s32 0, %v179
    %v197 = vsel %vm195, %v196, %v179
    %v198 = vshrl.u32 %v197, 4
    %v199 = vand.u32 %v197, 15
    %v200 = vsub.s32 0, %v199
    %v201 = vsel %vm195, %v200, %v199
    %vm202 = vcmp.lt.s32.totalorder %v180, 0
    %v203 = vsub.s32 0, %v180
    %v204 = vsel %vm202, %v203, %v180
    %v205 = vshrl.u32 %v204, 4
    %v206 = vand.u32 %v204, 15
    %v207 = vsub.s32 0, %v206
    %v208 = vsel %vm202, %v207, %v206
    %vm209 = vcmp.ne.s32.totalorder %v187, 0
    %vm210 = vcmp.ne.s32.totalorder %v194, 0
    %vm211 = vcmp.ne.s32.totalorder %v201, 0
    %vm212 = vcmp.ne.s32.totalorder %v208, 0
    %vm213 = vcmp.lt.s32.totalorder %v187, 0
    %vm214 = vcmp.lt.s32.totalorder %v194, 0
    %vm215 = vcmp.lt.s32.totalorder %v201, 0
    %vm216 = vcmp.lt.s32.totalorder %v208, 0
    %vm217 = vmand %vm213, %vm209
    %vm218 = vmand %vm214, %vm210
    %vm219 = vmand %vm215, %vm211
    %vm220 = vmand %vm216, %vm212
    %v221 = vadd.s32 %v187, 16
    %v222 = vadd.s32 %v194, 16
    %v223 = vadd.s32 %v201, 16
    %v224 = vadd.s32 %v208, 16
    %v225 = vsel %vm217, %v221, %v187
    %v226 = vsel %vm218, %v222, %v194
    %v227 = vsel %vm219, %v223, %v201
    %v228 = vsel %vm220, %v224, %v208
    %vm229 = vcmp.ge.s32.totalorder %v225, 1
    %vm230 = vcmp.ge.s32.totalorder %v226, 1
    %vm231 = vcmp.ge.s32.totalorder %v227, 1
    %vm232 = vcmp.ge.s32.totalorder %v228, 1
    %vm233 = vcmp.le.s32.totalorder %v225, 14
    %vm234 = vcmp.le.s32.totalorder %v226, 14
    %vm235 = vcmp.le.s32.totalorder %v227, 14
    %vm236 = vcmp.le.s32.totalorder %v228, 14
    %v237 = vpack.c.bf16 %v169, %v167
    %v238 = vpack.c.bf16 %v174, %v172
    %v239 = vld [vmem:[%s3] sm:$0xff]
    %v240 = vld [vmem:[%s3 + $0x8] sm:$0xff]
    %v241 = vld [vmem:[%s3 + $0x10] sm:$0xff]
    %v242 = vld [vmem:[%s3 + $0x18] sm:$0xff]
    %v243 = vld [vmem:[%s3 + $0x20] sm:$0xff]
    %v244 = vld [vmem:[%s3 + $0x28] sm:$0xff]
    %v245 = vld [vmem:[%s3 + $0x30] sm:$0xff]
    %v246 = vld [vmem:[%s3 + $0x38] sm:$0xff]
    %v247 = vld [vmem:[%s3 + $0x40] sm:$0xff]
    %v248 = vld [vmem:[%s3 + $0x48] sm:$0xff]
    %v249 = vld [vmem:[%s3 + $0x50] sm:$0xff]
    %v250 = vld [vmem:[%s3 + $0x58] sm:$0xff]
    %v251 = vld [vmem:[%s3 + $0x60] sm:$0xff]
    %v252 = vld [vmem:[%s3 + $0x68] sm:$0xff]
    %v253 = vld [vmem:[%s3 + $0x70] sm:$0xff]
    %v254 = vld [vmem:[%s3 + $0x78] sm:$0xff]
    %v255 = vld [vmem:[%s3 + $0x80] sm:$0xff]
    %v256 = vld [vmem:[%s3 + $0x88] sm:$0xff]
    %v257 = vld [vmem:[%s3 + $0x90] sm:$0xff]
    %v258 = vld [vmem:[%s3 + $0x98] sm:$0xff]
    %v259 = vld [vmem:[%s3 + $0xa0] sm:$0xff]
    %v260 = vld [vmem:[%s3 + $0xa8] sm:$0xff]
    %v261 = vld [vmem:[%s3 + $0xb0] sm:$0xff]
    %v262 = vld [vmem:[%s3 + $0xb8] sm:$0xff]
    %v263 = vld [vmem:[%s3 + $0xc0] sm:$0xff]
    %v264 = vld [vmem:[%s3 + $0xc8] sm:$0xff]
    %v265 = vld [vmem:[%s3 + $0xd0] sm:$0xff]
    %v266 = vld [vmem:[%s3 + $0xd8] sm:$0xff]
    %v267 = vld [vmem:[%s3 + $0xe0] sm:$0xff]
    %v268 = vld [vmem:[%s3 + $0xe8] sm:$0xff]
    %v269 = vld [vmem:[%s3 + $0xf0] sm:$0xff]
    %v270 = vld [vmem:[%s3 + $0xf8] sm:$0xff]
    %v271 = vld [vmem:[%s3 + $0x100] sm:$0xff]
    %v272 = vld [vmem:[%s3 + $0x108] sm:$0xff]
    %v273 = vld [vmem:[%s3 + $0x110] sm:$0xff]
    %v274 = vld [vmem:[%s3 + $0x118] sm:$0xff]
    %v275 = vld [vmem:[%s3 + $0x120] sm:$0xff]
    %v276 = vld [vmem:[%s3 + $0x128] sm:$0xff]
    %v277 = vld [vmem:[%s3 + $0x130] sm:$0xff]
    %v278 = vld [vmem:[%s3 + $0x138] sm:$0xff]
    %v279 = vld [vmem:[%s3 + $0x140] sm:$0xff]
    %v280 = vld [vmem:[%s3 + $0x148] sm:$0xff]
    %v281 = vld [vmem:[%s3 + $0x150] sm:$0xff]
    %v282 = vld [vmem:[%s3 + $0x158] sm:$0xff]
    %v283 = vld [vmem:[%s3 + $0x160] sm:$0xff]
    %v284 = vld [vmem:[%s3 + $0x168] sm:$0xff]
    %v285 = vld [vmem:[%s3 + $0x170] sm:$0xff]
    %v286 = vld [vmem:[%s3 + $0x178] sm:$0xff]
    %v335 = vunpack.c.l.b16 %v239
    %v336 = vunpack.c.h.b16 %v239
    %v337 = vunpack.c.l.b16 %v240
    %v338 = vunpack.c.h.b16 %v240
    %v339 = vunpack.c.l.b16 %v241
    %v340 = vunpack.c.h.b16 %v241
    %v341 = vunpack.c.l.b16 %v242
    %v342 = vunpack.c.h.b16 %v242
    %v343 = vunpack.c.l.b16 %v243
    %v344 = vunpack.c.h.b16 %v243
    %v345 = vunpack.c.l.b16 %v244
    %v346 = vunpack.c.h.b16 %v244
    %v347 = vunpack.c.l.b16 %v245
    %v348 = vunpack.c.h.b16 %v245
    %v349 = vunpack.c.l.b16 %v246
    %v350 = vunpack.c.h.b16 %v246
    %v351 = vunpack.c.l.b16 %v247
    %v352 = vunpack.c.h.b16 %v247
    %v353 = vunpack.c.l.b16 %v248
    %v354 = vunpack.c.h.b16 %v248
    %v355 = vunpack.c.l.b16 %v249
    %v356 = vunpack.c.h.b16 %v249
    %v357 = vunpack.c.l.b16 %v250
    %v358 = vunpack.c.h.b16 %v250
    %v359 = vunpack.c.l.b16 %v251
    %v360 = vunpack.c.h.b16 %v251
    %v361 = vunpack.c.l.b16 %v252
    %v362 = vunpack.c.h.b16 %v252
    %v363 = vunpack.c.l.b16 %v253
    %v364 = vunpack.c.h.b16 %v253
    %v365 = vunpack.c.l.b16 %v254
    %v366 = vunpack.c.h.b16 %v254
    %v367 = vunpack.c.l.b16 %v255
    %v368 = vunpack.c.h.b16 %v255
    %v369 = vunpack.c.l.b16 %v256
    %v370 = vunpack.c.h.b16 %v256
    %v371 = vunpack.c.l.b16 %v257
    %v372 = vunpack.c.h.b16 %v257
    %v373 = vunpack.c.l.b16 %v258
    %v374 = vunpack.c.h.b16 %v258
    %v375 = vunpack.c.l.b16 %v259
    %v376 = vunpack.c.h.b16 %v259
    %v377 = vunpack.c.l.b16 %v260
    %v378 = vunpack.c.h.b16 %v260
    %v379 = vunpack.c.l.b16 %v261
    %v380 = vunpack.c.h.b16 %v261
    %v381 = vunpack.c.l.b16 %v262
    %v382 = vunpack.c.h.b16 %v262
    %v383 = vunpack.c.l.b16 %v263
    %v384 = vunpack.c.h.b16 %v263
    %v385 = vunpack.c.l.b16 %v264
    %v386 = vunpack.c.h.b16 %v264
    %v387 = vunpack.c.l.b16 %v265
    %v388 = vunpack.c.h.b16 %v265
    %v389 = vunpack.c.l.b16 %v266
    %v390 = vunpack.c.h.b16 %v266
    %v391 = vunpack.c.l.b16 %v267
    %v392 = vunpack.c.h.b16 %v267
    %v393 = vunpack.c.l.b16 %v268
    %v394 = vunpack.c.h.b16 %v268
    %v395 = vunpack.c.l.b16 %v269
    %v396 = vunpack.c.h.b16 %v269
    %v397 = vunpack.c.l.b16 %v270
    %v398 = vunpack.c.h.b16 %v270
    %v399 = vunpack.c.l.b16 %v271
    %v400 = vunpack.c.h.b16 %v271
    %v401 = vunpack.c.l.b16 %v272
    %v402 = vunpack.c.h.b16 %v272
    %v403 = vunpack.c.l.b16 %v273
    %v404 = vunpack.c.h.b16 %v273
    %v405 = vunpack.c.l.b16 %v274
    %v406 = vunpack.c.h.b16 %v274
    %v407 = vunpack.c.l.b16 %v275
    %v408 = vunpack.c.h.b16 %v275
    %v409 = vunpack.c.l.b16 %v276
    %v410 = vunpack.c.h.b16 %v276
    %v411 = vunpack.c.l.b16 %v277
    %v412 = vunpack.c.h.b16 %v277
    %v413 = vunpack.c.l.b16 %v278
    %v414 = vunpack.c.h.b16 %v278
    %v415 = vunpack.c.l.b16 %v279
    %v416 = vunpack.c.h.b16 %v279
    %v417 = vunpack.c.l.b16 %v280
    %v418 = vunpack.c.h.b16 %v280
    %v419 = vunpack.c.l.b16 %v281
    %v420 = vunpack.c.h.b16 %v281
    %v421 = vunpack.c.l.b16 %v282
    %v422 = vunpack.c.h.b16 %v282
    %v423 = vunpack.c.l.b16 %v283
    %v424 = vunpack.c.h.b16 %v283
    %v425 = vunpack.c.l.b16 %v284
    %v426 = vunpack.c.h.b16 %v284
    %v427 = vunpack.c.l.b16 %v285
    %v428 = vunpack.c.h.b16 %v285
    %v429 = vunpack.c.l.b16 %v286
    %v430 = vunpack.c.h.b16 %v286
    %v431 = vpack.c.b16 %v341, %v335
    %v432 = vpack.c.b16 %v342, %v336
    %v433 = vpack.c.b16 %v343, %v337
    %v434 = vpack.c.b16 %v344, %v338
    %v435 = vpack.c.b16 %v345, %v339
    %v436 = vpack.c.b16 %v346, %v340
    %v437 = vpack.c.b16 %v353, %v347
    %v438 = vpack.c.b16 %v354, %v348
    %v439 = vpack.c.b16 %v355, %v349
    %v440 = vpack.c.b16 %v356, %v350
    %v441 = vpack.c.b16 %v357, %v351
    %v442 = vpack.c.b16 %v358, %v352
    %v443 = vpack.c.b16 %v365, %v359
    %v444 = vpack.c.b16 %v366, %v360
    %v445 = vpack.c.b16 %v367, %v361
    %v446 = vpack.c.b16 %v368, %v362
    %v447 = vpack.c.b16 %v369, %v363
    %v448 = vpack.c.b16 %v370, %v364
    %v449 = vpack.c.b16 %v377, %v371
    %v450 = vpack.c.b16 %v378, %v372
    %v451 = vpack.c.b16 %v379, %v373
    %v452 = vpack.c.b16 %v380, %v374
    %v453 = vpack.c.b16 %v381, %v375
    %v454 = vpack.c.b16 %v382, %v376
    %v455 = vpack.c.b16 %v389, %v383
    %v456 = vpack.c.b16 %v390, %v384
    %v457 = vpack.c.b16 %v391, %v385
    %v458 = vpack.c.b16 %v392, %v386
    %v459 = vpack.c.b16 %v393, %v387
    %v460 = vpack.c.b16 %v394, %v388
    %v461 = vpack.c.b16 %v401, %v395
    %v462 = vpack.c.b16 %v402, %v396
    %v463 = vpack.c.b16 %v403, %v397
    %v464 = vpack.c.b16 %v404, %v398
    %v465 = vpack.c.b16 %v405, %v399
    %v466 = vpack.c.b16 %v406, %v400
    %v467 = vpack.c.b16 %v413, %v407
    %v468 = vpack.c.b16 %v414, %v408
    %v469 = vpack.c.b16 %v415, %v409
    %v470 = vpack.c.b16 %v416, %v410
    %v471 = vpack.c.b16 %v417, %v411
    %v472 = vpack.c.b16 %v418, %v412
    %v473 = vpack.c.b16 %v425, %v419
    %v474 = vpack.c.b16 %v426, %v420
    %v475 = vpack.c.b16 %v427, %v421
    %v476 = vpack.c.b16 %v428, %v422
    %v477 = vpack.c.b16 %v429, %v423
    %v478 = vpack.c.b16 %v430, %v424
    %527 = vmatpush.bf16.msra.mxu0 %v473
    %528 = vmatpush.bf16.msra.mxu0 %v467
    %529 = vmatpush.bf16.msra.mxu0 %v461
    %530 = vmatpush.bf16.msra.mxu0 %v455
    %531 = vmatpush.bf16.msra.mxu0 %v449
    %532 = vmatpush.bf16.msra.mxu0 %v443
    %533 = vmatpush.bf16.msra.mxu0 %v437
    %534 = vmatpush.bf16.msra.mxu0 %v431
    %535 = vmatmul.bf16.gmra.mxu0 %v237
    %v536 = vpop.f32.mrf.mxu0
    %v537 = vadd.f32 0.0, %v536
    %v538 = vpop.f32.mrf.mxu0
    %v539 = vadd.f32 0.0, %v538
    %540 = vmatmul.bf16.gmra.mxu0 %v238
    %v541 = vpop.f32.mrf.mxu0
    %v542 = vadd.f32 0.0, %v541
    %v543 = vpop.f32.mrf.mxu0
    %v544 = vadd.f32 0.0, %v543
    %545 = vdwg.mxu0
    %546 = vmatpush.bf16.msra.mxu0 %v474
    %547 = vmatpush.bf16.msra.mxu0 %v468
    %548 = vmatpush.bf16.msra.mxu0 %v462
    %549 = vmatpush.bf16.msra.mxu0 %v456
    %550 = vmatpush.bf16.msra.mxu0 %v450
    %551 = vmatpush.bf16.msra.mxu0 %v444
    %552 = vmatpush.bf16.msra.mxu0 %v438
    %553 = vmatpush.bf16.msra.mxu0 %v432
    %554 = vmatmul.bf16.gmra.mxu0 %v237
    %v555 = vpop.f32.mrf.mxu0
    %v556 = vadd.f32 0.0, %v555
    %v557 = vpop.f32.mrf.mxu0
    %v558 = vadd.f32 0.0, %v557
    %559 = vmatmul.bf16.gmra.mxu0 %v238
    %v560 = vpop.f32.mrf.mxu0
    %v561 = vadd.f32 0.0, %v560
    %v562 = vpop.f32.mrf.mxu0
    %v563 = vadd.f32 0.0, %v562
    %564 = vdwg.mxu0
    %565 = vmatpush.bf16.msra.mxu0 %v475
    %566 = vmatpush.bf16.msra.mxu0 %v469
    %567 = vmatpush.bf16.msra.mxu0 %v463
    %568 = vmatpush.bf16.msra.mxu0 %v457
    %569 = vmatpush.bf16.msra.mxu0 %v451
    %570 = vmatpush.bf16.msra.mxu0 %v445
    %571 = vmatpush.bf16.msra.mxu0 %v439
    %572 = vmatpush.bf16.msra.mxu0 %v433
    %573 = vmatmul.bf16.gmra.mxu0 %v237
    %v574 = vpop.f32.mrf.mxu0
    %v575 = vadd.f32 0.0, %v574
    %v576 = vpop.f32.mrf.mxu0
    %v577 = vadd.f32 0.0, %v576
    %578 = vmatmul.bf16.gmra.mxu0 %v238
    %v579 = vpop.f32.mrf.mxu0
    %v580 = vadd.f32 0.0, %v579
    %v581 = vpop.f32.mrf.mxu0
    %v582 = vadd.f32 0.0, %v581
    %583 = vdwg.mxu0
    %584 = vmatpush.bf16.msra.mxu0 %v476
    %585 = vmatpush.bf16.msra.mxu0 %v470
    %586 = vmatpush.bf16.msra.mxu0 %v464
    %587 = vmatpush.bf16.msra.mxu0 %v458
    %588 = vmatpush.bf16.msra.mxu0 %v452
    %589 = vmatpush.bf16.msra.mxu0 %v446
    %590 = vmatpush.bf16.msra.mxu0 %v440
    %591 = vmatpush.bf16.msra.mxu0 %v434
    %592 = vmatmul.bf16.gmra.mxu0 %v237
    %v593 = vpop.f32.mrf.mxu0
    %v594 = vadd.f32 0.0, %v593
    %v595 = vpop.f32.mrf.mxu0
    %v596 = vadd.f32 0.0, %v595
    %597 = vmatmul.bf16.gmra.mxu0 %v238
    %v598 = vpop.f32.mrf.mxu0
    %v599 = vadd.f32 0.0, %v598
    %v600 = vpop.f32.mrf.mxu0
    %v601 = vadd.f32 0.0, %v600
    %602 = vdwg.mxu0
    %603 = vmatpush.bf16.msra.mxu0 %v477
    %604 = vmatpush.bf16.msra.mxu0 %v471
    %605 = vmatpush.bf16.msra.mxu0 %v465
    %606 = vmatpush.bf16.msra.mxu0 %v459
    %607 = vmatpush.bf16.msra.mxu0 %v453
    %608 = vmatpush.bf16.msra.mxu0 %v447
    %609 = vmatpush.bf16.msra.mxu0 %v441
    %610 = vmatpush.bf16.msra.mxu0 %v435
    %611 = vmatmul.bf16.gmra.mxu0 %v237
    %v612 = vpop.f32.mrf.mxu0
    %v613 = vadd.f32 0.0, %v612
    %v614 = vpop.f32.mrf.mxu0
    %v615 = vadd.f32 0.0, %v614
    %616 = vmatmul.bf16.gmra.mxu0 %v238
    %v617 = vpop.f32.mrf.mxu0
    %v618 = vadd.f32 0.0, %v617
    %v619 = vpop.f32.mrf.mxu0
    %v620 = vadd.f32 0.0, %v619
    %621 = vdwg.mxu0
    %622 = vmatpush.bf16.msra.mxu0 %v478
    %623 = vmatpush.bf16.msra.mxu0 %v472
    %624 = vmatpush.bf16.msra.mxu0 %v466
    %625 = vmatpush.bf16.msra.mxu0 %v460
    %626 = vmatpush.bf16.msra.mxu0 %v454
    %627 = vmatpush.bf16.msra.mxu0 %v448
    %628 = vmatpush.bf16.msra.mxu0 %v442
    %629 = vmatpush.bf16.msra.mxu0 %v436
    %630 = vmatmul.bf16.gmra.mxu0 %v237
    %v631 = vpop.f32.mrf.mxu0
    %v632 = vadd.f32 0.0, %v631
    %v633 = vpop.f32.mrf.mxu0
    %v634 = vadd.f32 0.0, %v633
    %635 = vmatmul.bf16.gmra.mxu0 %v238
    %v636 = vpop.f32.mrf.mxu0
    %v637 = vadd.f32 0.0, %v636
    %v638 = vpop.f32.mrf.mxu0
    %v639 = vadd.f32 0.0, %v638
    %640 = vdwg.mxu0
    %v641 = vrot.slane %v537, 7
    %v642 = vrot.slane %v539, 7
    %v643 = vrot.slane %v542, 7
    %v644 = vrot.slane %v544, 7
    %vm645 = vcmp.lt.s32.totalorder %v177, 1
    %v646 = vsel %vm645, %v643, %v644
    %v647 = vsel %vm645, %v642, %v643
    %v648 = vsel %vm645, %v641, %v642
    %v649 = vsel %vm645, %v644, %v641
    %v650 = vsel %vm229, %v649, 0.0
    %v651 = vsel %vm230, %v648, 0.0
    %v652 = vsel %vm231, %v647, 0.0
    %v653 = vsel %vm232, %v646, 0.0
    %v654 = vadd.f32 %v556, %v650
    %v655 = vadd.f32 %v558, %v651
    %v656 = vadd.f32 %v561, %v652
    %v657 = vadd.f32 %v563, %v653
    %v658 = vrot.slane %v575, 1
    %v659 = vrot.slane %v577, 1
    %v660 = vrot.slane %v580, 1
    %v661 = vrot.slane %v582, 1
    %vm662 = vcmp.lt.s32.totalorder %v177, 7
    %v663 = vsel %vm662, %v660, %v661
    %v664 = vsel %vm662, %v659, %v660
    %v665 = vsel %vm662, %v658, %v659
    %v666 = vsel %vm662, %v661, %v658
    %v667 = vsel %vm233, %v665, 0.0
    %v668 = vsel %vm234, %v664, 0.0
    %v669 = vsel %vm235, %v663, 0.0
    %v670 = vsel %vm236, %v666, 0.0
    %v671 = vadd.f32 %v654, %v667
    %v672 = vadd.f32 %v655, %v668
    %v673 = vadd.f32 %v656, %v669
    %v674 = vadd.f32 %v657, %v670
    %v675 = vld [vmem:[%s4] sm:$0x1]
    %v677 = vperm.slane %v675, 0
    %v679 = vadd.f32 %v671, %v677
    %v680 = vadd.f32 %v672, %v677
    %v681 = vadd.f32 %v673, %v677
    %v682 = vadd.f32 %v674, %v677
    %v683 = vmax.f32 %v679, 0.0
    %v684 = vmax.f32 %v680, 0.0
    %v685 = vmax.f32 %v681, 0.0
    %v686 = vmax.f32 %v682, 0.0
    %v687 = vrot.slane %v594, 7
    %v688 = vrot.slane %v596, 7
    %v689 = vrot.slane %v599, 7
    %v690 = vrot.slane %v601, 7
    %v691 = vsel %vm645, %v689, %v690
    %v692 = vsel %vm645, %v688, %v689
    %v693 = vsel %vm645, %v687, %v688
    %v694 = vsel %vm645, %v690, %v687
    %v695 = vsel %vm229, %v694, 0.0
    %v696 = vsel %vm230, %v693, 0.0
    %v697 = vsel %vm231, %v692, 0.0
    %v698 = vsel %vm232, %v691, 0.0
    %v699 = vadd.f32 %v613, %v695
    %v700 = vadd.f32 %v615, %v696
    %v701 = vadd.f32 %v618, %v697
    %v702 = vadd.f32 %v620, %v698
    %v703 = vrot.slane %v632, 1
    %v704 = vrot.slane %v634, 1
    %v705 = vrot.slane %v637, 1
    %v706 = vrot.slane %v639, 1
    %v707 = vsel %vm662, %v705, %v706
    %v708 = vsel %vm662, %v704, %v705
    %v709 = vsel %vm662, %v703, %v704
    %v710 = vsel %vm662, %v706, %v703
    %v711 = vsel %vm233, %v709, 0.0
    %v712 = vsel %vm234, %v708, 0.0
    %v713 = vsel %vm235, %v707, 0.0
    %v714 = vsel %vm236, %v710, 0.0
    %v715 = vadd.f32 %v699, %v711
    %v716 = vadd.f32 %v700, %v712
    %v717 = vadd.f32 %v701, %v713
    %v718 = vadd.f32 %v702, %v714
    %v719 = vld [vmem:[%s5] sm:$0x1]
    %v721 = vperm.slane %v719, 0
    %v723 = vadd.f32 %v715, %v721
    %v724 = vadd.f32 %v716, %v721
    %v725 = vadd.f32 %v717, %v721
    %v726 = vadd.f32 %v718, %v721
    %v727 = vmax.f32 %v723, 0.0
    %v728 = vmax.f32 %v724, 0.0
    %v729 = vmax.f32 %v725, 0.0
    %v730 = vmax.f32 %v726, 0.0
    %v731 = vpack.c.bf16 %v728, %v727
    %v732 = vpack.c.bf16 %v730, %v729
    %v733 = vld [vmem:[#allocation4] sm:$0xff]
    %v734 = vld [vmem:[#allocation4 + $0x8] sm:$0xf]
    %v735 = vld [vmem:[#allocation4 + $0xc] sm:$0xff]
    %v736 = vld [vmem:[#allocation4 + $0x14] sm:$0xf]
    %v737 = vld [vmem:[#allocation4 + $0x18] sm:$0xff]
    %v738 = vld [vmem:[#allocation4 + $0x20] sm:$0xf]
    %v739 = vld [vmem:[#allocation4 + $0x24] sm:$0xff]
    %v740 = vld [vmem:[#allocation4 + $0x2c] sm:$0xf]
    %v741 = vld [vmem:[#allocation4 + $0x30] sm:$0xff]
    %v742 = vld [vmem:[#allocation4 + $0x38] sm:$0xf]
    %v743 = vld [vmem:[#allocation4 + $0x3c] sm:$0xff]
    %v744 = vld [vmem:[#allocation4 + $0x44] sm:$0xf]
    %v745 = vld [vmem:[#allocation4 + $0x48] sm:$0xff]
    %v746 = vld [vmem:[#allocation4 + $0x50] sm:$0xf]
    %v747 = vld [vmem:[#allocation4 + $0x54] sm:$0xff]
    %v748 = vld [vmem:[#allocation4 + $0x5c] sm:$0xf]
    %v749 = vld [vmem:[#allocation4 + $0x60] sm:$0xff]
    %v750 = vld [vmem:[#allocation4 + $0x68] sm:$0xf]
    %v751 = vld [vmem:[#allocation4 + $0x6c] sm:$0xff]
    %v752 = vld [vmem:[#allocation4 + $0x74] sm:$0xf]
    %v753 = vld [vmem:[#allocation4 + $0x78] sm:$0xff]
    %v754 = vld [vmem:[#allocation4 + $0x80] sm:$0xf]
    %v755 = vld [vmem:[#allocation4 + $0x84] sm:$0xff]
    %v756 = vld [vmem:[#allocation4 + $0x8c] sm:$0xf]
    %v757 = vld [vmem:[#allocation4 + $0x90] sm:$0xff]
    %v758 = vld [vmem:[#allocation4 + $0x98] sm:$0xf]
    %v759 = vld [vmem:[#allocation4 + $0x9c] sm:$0xff]
    %v760 = vld [vmem:[#allocation4 + $0xa4] sm:$0xf]
    %v761 = vld [vmem:[#allocation4 + $0xa8] sm:$0xff]
    %v762 = vld [vmem:[#allocation4 + $0xb0] sm:$0xf]
    %v763 = vld [vmem:[#allocation4 + $0xb4] sm:$0xff]
    %v764 = vld [vmem:[#allocation4 + $0xbc] sm:$0xf]
    %v797 = vunpack.c.l.b16 %v733
    %v798 = vunpack.c.h.b16 %v733
    %v799 = vunpack.c.l.b16 %v734
    %v800 = vunpack.c.l.b16 %v735
    %v801 = vunpack.c.h.b16 %v735
    %v802 = vunpack.c.l.b16 %v736
    %v803 = vunpack.c.l.b16 %v737
    %v804 = vunpack.c.h.b16 %v737
    %v805 = vunpack.c.l.b16 %v738
    %v806 = vunpack.c.l.b16 %v739
    %v807 = vunpack.c.h.b16 %v739
    %v808 = vunpack.c.l.b16 %v740
    %v809 = vunpack.c.l.b16 %v741
    %v810 = vunpack.c.h.b16 %v741
    %v811 = vunpack.c.l.b16 %v742
    %v812 = vunpack.c.l.b16 %v743
    %v813 = vunpack.c.h.b16 %v743
    %v814 = vunpack.c.l.b16 %v744
    %v815 = vunpack.c.l.b16 %v745
    %v816 = vunpack.c.h.b16 %v745
    %v817 = vunpack.c.l.b16 %v746
    %v818 = vunpack.c.l.b16 %v747
    %v819 = vunpack.c.h.b16 %v747
    %v820 = vunpack.c.l.b16 %v748
    %v821 = vunpack.c.l.b16 %v749
    %v822 = vunpack.c.h.b16 %v749
    %v823 = vunpack.c.l.b16 %v750
    %v824 = vunpack.c.l.b16 %v751
    %v825 = vunpack.c.h.b16 %v751
    %v826 = vunpack.c.l.b16 %v752
    %v827 = vunpack.c.l.b16 %v753
    %v828 = vunpack.c.h.b16 %v753
    %v829 = vunpack.c.l.b16 %v754
    %v830 = vunpack.c.l.b16 %v755
    %v831 = vunpack.c.h.b16 %v755
    %v832 = vunpack.c.l.b16 %v756
    %v833 = vunpack.c.l.b16 %v757
    %v834 = vunpack.c.h.b16 %v757
    %v835 = vunpack.c.l.b16 %v758
    %v836 = vunpack.c.l.b16 %v759
    %v837 = vunpack.c.h.b16 %v759
    %v838 = vunpack.c.l.b16 %v760
    %v839 = vunpack.c.l.b16 %v761
    %v840 = vunpack.c.h.b16 %v761
    %v841 = vunpack.c.l.b16 %v762
    %v842 = vunpack.c.l.b16 %v763
    %v843 = vunpack.c.h.b16 %v763
    %v844 = vunpack.c.l.b16 %v764
    %v845 = vpack.c.b16 %v800, %v797
    %v846 = vpack.c.b16 %v801, %v798
    %v847 = vpack.c.b16 %v802, %v799
    %v848 = vpack.c.b16 %v806, %v803
    %v849 = vpack.c.b16 %v807, %v804
    %v850 = vpack.c.b16 %v808, %v805
    %v851 = vpack.c.b16 %v812, %v809
    %v852 = vpack.c.b16 %v813, %v810
    %v853 = vpack.c.b16 %v814, %v811
    %v854 = vpack.c.b16 %v818, %v815
    %v855 = vpack.c.b16 %v819, %v816
    %v856 = vpack.c.b16 %v820, %v817
    %v857 = vpack.c.b16 %v824, %v821
    %v858 = vpack.c.b16 %v825, %v822
    %v859 = vpack.c.b16 %v826, %v823
    %v860 = vpack.c.b16 %v830, %v827
    %v861 = vpack.c.b16 %v831, %v828
    %v862 = vpack.c.b16 %v832, %v829
    %v863 = vpack.c.b16 %v836, %v833
    %v864 = vpack.c.b16 %v837, %v834
    %v865 = vpack.c.b16 %v838, %v835
    %v866 = vpack.c.b16 %v842, %v839
    %v867 = vpack.c.b16 %v843, %v840
    %v868 = vpack.c.b16 %v844, %v841
    %893 = vmatpush.bf16.msra.mxu0 %v866
    %894 = vmatpush.bf16.msra.mxu0 %v863
    %895 = vmatpush.bf16.msra.mxu0 %v860
    %896 = vmatpush.bf16.msra.mxu0 %v857
    %897 = vmatpush.bf16.msra.mxu0 %v854
    %898 = vmatpush.bf16.msra.mxu0 %v851
    %899 = vmatpush.bf16.msra.mxu0 %v848
    %900 = vmatpush.bf16.msra.mxu0 %v845
    %901 = vmatmul.bf16.gmra.mxu0 %v731
    %v902 = vpop.f32.mrf.mxu0
    %v903 = vadd.f32 0.0, %v902
    %v904 = vpop.f32.mrf.mxu0
    %v905 = vadd.f32 0.0, %v904
    %906 = vmatmul.bf16.gmra.mxu0 %v732
    %v907 = vpop.f32.mrf.mxu0
    %v908 = vadd.f32 0.0, %v907
    %v909 = vpop.f32.mrf.mxu0
    %v910 = vadd.f32 0.0, %v909
    %911 = vdwg.mxu0
    %912 = vmatpush.bf16.msra.mxu0 %v867
    %913 = vmatpush.bf16.msra.mxu0 %v864
    %914 = vmatpush.bf16.msra.mxu0 %v861
    %915 = vmatpush.bf16.msra.mxu0 %v858
    %916 = vmatpush.bf16.msra.mxu0 %v855
    %917 = vmatpush.bf16.msra.mxu0 %v852
    %918 = vmatpush.bf16.msra.mxu0 %v849
    %919 = vmatpush.bf16.msra.mxu0 %v846
    %920 = vmatmul.bf16.gmra.mxu0 %v731
    %v921 = vpop.f32.mrf.mxu0
    %v922 = vadd.f32 0.0, %v921
    %v923 = vpop.f32.mrf.mxu0
    %v924 = vadd.f32 0.0, %v923
    %925 = vmatmul.bf16.gmra.mxu0 %v732
    %v926 = vpop.f32.mrf.mxu0
    %v927 = vadd.f32 0.0, %v926
    %v928 = vpop.f32.mrf.mxu0
    %v929 = vadd.f32 0.0, %v928
    %930 = vdwg.mxu0
    %931 = vmatpush.bf16.msra.mxu0 %v868
    %932 = vmatpush.bf16.msra.mxu0 %v865
    %933 = vmatpush.bf16.msra.mxu0 %v862
    %934 = vmatpush.bf16.msra.mxu0 %v859
    %935 = vmatpush.bf16.msra.mxu0 %v856
    %936 = vmatpush.bf16.msra.mxu0 %v853
    %937 = vmatpush.bf16.msra.mxu0 %v850
    %938 = vmatpush.bf16.msra.mxu0 %v847
    %939 = vmatmul.bf16.gmra.mxu0 %v731
    %v940 = vpop.f32.mrf.mxu0
    %v941 = vadd.f32 0.0, %v940
    %v942 = vpop.f32.mrf.mxu0
    %v943 = vadd.f32 0.0, %v942
    %944 = vmatmul.bf16.gmra.mxu0 %v732
    %v945 = vpop.f32.mrf.mxu0
    %v946 = vadd.f32 0.0, %v945
    %v947 = vpop.f32.mrf.mxu0
    %v948 = vadd.f32 0.0, %v947
    %949 = vdwg.mxu0
    %v950 = vrot.slane %v903, 7
    %v951 = vrot.slane %v905, 7
    %v952 = vrot.slane %v908, 7
    %v953 = vrot.slane %v910, 7
    %v954 = vsel %vm645, %v952, %v953
    %v955 = vsel %vm645, %v951, %v952
    %v956 = vsel %vm645, %v950, %v951
    %v957 = vsel %vm645, %v953, %v950
    %v958 = vsel %vm229, %v957, 0.0
    %v959 = vsel %vm230, %v956, 0.0
    %v960 = vsel %vm231, %v955, 0.0
    %v961 = vsel %vm232, %v954, 0.0
    %v962 = vadd.f32 %v922, %v958
    %v963 = vadd.f32 %v924, %v959
    %v964 = vadd.f32 %v927, %v960
    %v965 = vadd.f32 %v929, %v961
    %v966 = vrot.slane %v941, 1
    %v967 = vrot.slane %v943, 1
    %v968 = vrot.slane %v946, 1
    %v969 = vrot.slane %v948, 1
    %v970 = vsel %vm662, %v968, %v969
    %v971 = vsel %vm662, %v967, %v968
    %v972 = vsel %vm662, %v966, %v967
    %v973 = vsel %vm662, %v969, %v966
    %v974 = vsel %vm233, %v972, 0.0
    %v975 = vsel %vm234, %v971, 0.0
    %v976 = vsel %vm235, %v970, 0.0
    %v977 = vsel %vm236, %v973, 0.0
    %v978 = vadd.f32 %v962, %v974
    %v979 = vadd.f32 %v963, %v975
    %v980 = vadd.f32 %v964, %v976
    %v981 = vadd.f32 %v965, %v977
    %v982 = vld [vmem:[%s7] sm:$0x1]
    %v984 = vperm.slane %v982, 0
    %v986 = vadd.f32 %v978, %v984
    %v987 = vadd.f32 %v979, %v984
    %v988 = vadd.f32 %v980, %v984
    %v989 = vadd.f32 %v981, %v984
    %v990 = vmax.f32 %v986, 0.0
    %v991 = vmax.f32 %v987, 0.0
    %v992 = vmax.f32 %v988, 0.0
    %v993 = vmax.f32 %v989, 0.0
    %v994 = vadd.f32 %v683, %v990
    %v995 = vadd.f32 %v684, %v991
    %v996 = vadd.f32 %v685, %v992
    %v997 = vadd.f32 %v686, %v993
    %v998 = vadd.f32 %v994, %v995
    %v999 = vrot.slane %v998, 4
    %v1000 = vadd.f32 %v998, %v999
    %v1001 = vrot.slane %v1000, 2
    %v1002 = vadd.f32 %v1000, %v1001
    %v1003 = vrot.slane %v1002, 1
    %v1004 = vadd.f32 %v1002, %v1003
    %v1005 = vadd.f32 %v996, %v997
    %v1006 = vrot.slane %v1005, 4
    %v1007 = vadd.f32 %v1005, %v1006
    %v1008 = vrot.slane %v1007, 2
    %v1009 = vadd.f32 %v1007, %v1008
    %v1010 = vrot.slane %v1009, 1
    %v1011 = vadd.f32 %v1009, %v1010
    %v1012 = vld [vmem:[%s8] sm:$0xff]
    %v1013 = vld [vmem:[%s8 + $0x8] sm:$0xff]
    %v1014 = vld [vmem:[%s8 + $0x10] sm:$0xff]
    %v1015 = vld [vmem:[%s8 + $0x18] sm:$0xff]
    %v1016 = vld [vmem:[%s8 + $0x20] sm:$0xff]
    %v1017 = vld [vmem:[%s8 + $0x28] sm:$0xff]
    %v1018 = vld [vmem:[%s8 + $0x30] sm:$0xff]
    %v1019 = vld [vmem:[%s8 + $0x38] sm:$0xff]
    %v1020 = vld [vmem:[%s8 + $0x40] sm:$0xff]
    %v1021 = vld [vmem:[%s8 + $0x48] sm:$0xff]
    %v1022 = vld [vmem:[%s8 + $0x50] sm:$0xff]
    %v1023 = vld [vmem:[%s8 + $0x58] sm:$0xff]
    %v1024 = vld [vmem:[%s8 + $0x60] sm:$0xff]
    %v1025 = vld [vmem:[%s8 + $0x68] sm:$0xff]
    %v1026 = vld [vmem:[%s8 + $0x70] sm:$0xff]
    %v1027 = vld [vmem:[%s8 + $0x78] sm:$0xff]
    %v1028 = vld [vmem:[%s9] sm:$0x1]
    %v1030 = vperm.slane %v1028, 0
    %vm1034 = vcmask 1041409
    %v1035 = vsel %vm1034, %v1011, %v1004
    %1037 = vmatpush.msra.mxu0 %v1027
    %1038 = vmatpush.msra.mxu0 %v1026
    %1039 = vmatpush.msra.mxu0 %v1025
    %1040 = vmatpush.msra.mxu0 %v1024
    %1041 = vmatpush.msra.mxu0 %v1023
    %1042 = vmatpush.msra.mxu0 %v1022
    %1043 = vmatpush.msra.mxu0 %v1021
    %1044 = vmatpush.msra.mxu0 %v1020
    %1045 = vmatpush.msra.mxu0 %v1019
    %1046 = vmatpush.msra.mxu0 %v1018
    %1047 = vmatpush.msra.mxu0 %v1017
    %1048 = vmatpush.msra.mxu0 %v1016
    %1049 = vmatpush.msra.mxu0 %v1015
    %1050 = vmatpush.msra.mxu0 %v1014
    %1051 = vmatpush.msra.mxu0 %v1013
    %1052 = vmatpush.msra.mxu0 %v1012
    %1053 = vmatmul.f32.gmra.mxu0 %v1035
    %v1054 = vpop.f32.mrf.mxu0
    %v1055 = vadd.f32 %v1030, %v1054
    %1056 = vdwg.mxu0
    %v1057 = vsub.f32 0.0, %v1055
    %v1058 = vmul.f32 %v1057, 1.442695
    %v1059 = vpow.pop %v1058
    %v1060 = vadd.f32 %v1059, 1.0
    %v1061 = vrcp.pop %v1060
    %v1062 = vmul.f32 %v1060, %v1061
    %v1063 = vsub.f32 1.0, %v1062
    %v1064 = vmul.f32 %v1061, %v1063
    %v1065 = vadd.f32 %v1061, %v1064
    %vm1066 = vweird.f32 %v1060
    %vm1067 = vweird.f32 %v1061
    %vm1068 = vmor %vm1066, %vm1067
    %v1069 = vsel %vm1068, %v1061, %v1065
    %v1070 = vand.u32 2147483647, %v1060
    %vm1071 = vcmp.eq.f32.partialorder %v1070, 8.507059e+37
    %v1072 = vand.u32 %v1060, 2147483648
    %v1073 = vor.u32 1.1754944e-38, %v1072
    %v1074 = vsel %vm1071, %v1073, %v1069
    %v1075 = vmul.f32 1.0, %v1074
    %v1076 = vsub.f32 %v683, %v990
    %v1077 = vsub.f32 %v684, %v991
    %v1078 = vsub.f32 %v685, %v992
    %v1079 = vsub.f32 %v686, %v993
    %v1081 = vrot.slane %v1075, 1
    %v1082 = vperm.slane %v1075, 0
    %v1083 = vperm.slane %v1081, 0
    %v1086 = vmul.f32 %v1076, %v1082
    %v1087 = vmul.f32 %v1077, %v1082
    %v1088 = vmul.f32 %v1078, %v1083
    %v1089 = vmul.f32 %v1079, %v1083
    %v1090 = vadd.f32 %v990, %v1086
    %v1091 = vadd.f32 %v991, %v1087
    %v1092 = vadd.f32 %v992, %v1088
    %v1093 = vadd.f32 %v993, %v1089
    %v1094 = vpack.c.bf16 %v1090, %v1090
    %v1095 = vpack.c.bf16 %v1091, %v1091
    %v1096 = vpack.c.bf16 %v1092, %v1092
    %v1097 = vpack.c.bf16 %v1093, %v1093
    %v1102 = vunpack.c.l.b16 %v1094
    %v1103 = vunpack.c.l.b16 %v1095
    %v1104 = vunpack.c.l.b16 %v1096
    %v1105 = vunpack.c.l.b16 %v1097
    %v1106 = vpack.c.b16 %v1103, %v1102
    %v1107 = vpack.c.b16 %v1105, %v1104
    %v1110 = vld [vmem:[%s10] sm:$0xff]
    %v1111 = vld [vmem:[%s10 + $0x8] sm:$0xff]
    %v1112 = vld [vmem:[%s10 + $0x10] sm:$0xff]
    %v1113 = vld [vmem:[%s10 + $0x18] sm:$0xff]
    %v1114 = vld [vmem:[%s10 + $0x20] sm:$0xff]
    %v1115 = vld [vmem:[%s10 + $0x28] sm:$0xff]
    %v1116 = vld [vmem:[%s10 + $0x30] sm:$0xff]
    %v1117 = vld [vmem:[%s10 + $0x38] sm:$0xff]
    %v1118 = vld [vmem:[%s10 + $0x40] sm:$0xff]
    %v1119 = vld [vmem:[%s10 + $0x48] sm:$0xff]
    %v1120 = vld [vmem:[%s10 + $0x50] sm:$0xff]
    %v1121 = vld [vmem:[%s10 + $0x58] sm:$0xff]
    %v1122 = vld [vmem:[%s10 + $0x60] sm:$0xff]
    %v1123 = vld [vmem:[%s10 + $0x68] sm:$0xff]
    %v1124 = vld [vmem:[%s10 + $0x70] sm:$0xff]
    %v1125 = vld [vmem:[%s10 + $0x78] sm:$0xff]
    %v1126 = vld [vmem:[%s10 + $0x80] sm:$0xff]
    %v1127 = vld [vmem:[%s10 + $0x88] sm:$0xff]
    %v1128 = vld [vmem:[%s10 + $0x90] sm:$0xff]
    %v1129 = vld [vmem:[%s10 + $0x98] sm:$0xff]
    %v1130 = vld [vmem:[%s10 + $0xa0] sm:$0xff]
    %v1131 = vld [vmem:[%s10 + $0xa8] sm:$0xff]
    %v1132 = vld [vmem:[%s10 + $0xb0] sm:$0xff]
    %v1133 = vld [vmem:[%s10 + $0xb8] sm:$0xff]
    %v1134 = vld [vmem:[%s10 + $0xc0] sm:$0xff]
    %v1135 = vld [vmem:[%s10 + $0xc8] sm:$0xff]
    %v1136 = vld [vmem:[%s10 + $0xd0] sm:$0xff]
    %v1137 = vld [vmem:[%s10 + $0xd8] sm:$0xff]
    %v1138 = vld [vmem:[%s10 + $0xe0] sm:$0xff]
    %v1139 = vld [vmem:[%s10 + $0xe8] sm:$0xff]
    %v1140 = vld [vmem:[%s10 + $0xf0] sm:$0xff]
    %v1141 = vld [vmem:[%s10 + $0xf8] sm:$0xff]
    %v1142 = vld [vmem:[%s11] sm:$0x3]
    %v1144 = vperm.slane %v1142, 0
    %v1145 = vperm.slane %v1142, 1
    %v1180 = vunpack.c.l.b16 %v1110
    %v1181 = vunpack.c.h.b16 %v1110
    %v1182 = vunpack.c.l.b16 %v1111
    %v1183 = vunpack.c.h.b16 %v1111
    %v1184 = vunpack.c.l.b16 %v1112
    %v1185 = vunpack.c.h.b16 %v1112
    %v1186 = vunpack.c.l.b16 %v1113
    %v1187 = vunpack.c.h.b16 %v1113
    %v1188 = vunpack.c.l.b16 %v1114
    %v1189 = vunpack.c.h.b16 %v1114
    %v1190 = vunpack.c.l.b16 %v1115
    %v1191 = vunpack.c.h.b16 %v1115
    %v1192 = vunpack.c.l.b16 %v1116
    %v1193 = vunpack.c.h.b16 %v1116
    %v1194 = vunpack.c.l.b16 %v1117
    %v1195 = vunpack.c.h.b16 %v1117
    %v1196 = vunpack.c.l.b16 %v1118
    %v1197 = vunpack.c.h.b16 %v1118
    %v1198 = vunpack.c.l.b16 %v1119
    %v1199 = vunpack.c.h.b16 %v1119
    %v1200 = vunpack.c.l.b16 %v1120
    %v1201 = vunpack.c.h.b16 %v1120
    %v1202 = vunpack.c.l.b16 %v1121
    %v1203 = vunpack.c.h.b16 %v1121
    %v1204 = vunpack.c.l.b16 %v1122
    %v1205 = vunpack.c.h.b16 %v1122
    %v1206 = vunpack.c.l.b16 %v1123
    %v1207 = vunpack.c.h.b16 %v1123
    %v1208 = vunpack.c.l.b16 %v1124
    %v1209 = vunpack.c.h.b16 %v1124
    %v1210 = vunpack.c.l.b16 %v1125
    %v1211 = vunpack.c.h.b16 %v1125
    %v1212 = vunpack.c.l.b16 %v1126
    %v1213 = vunpack.c.h.b16 %v1126
    %v1214 = vunpack.c.l.b16 %v1127
    %v1215 = vunpack.c.h.b16 %v1127
    %v1216 = vunpack.c.l.b16 %v1128
    %v1217 = vunpack.c.h.b16 %v1128
    %v1218 = vunpack.c.l.b16 %v1129
    %v1219 = vunpack.c.h.b16 %v1129
    %v1220 = vunpack.c.l.b16 %v1130
    %v1221 = vunpack.c.h.b16 %v1130
    %v1222 = vunpack.c.l.b16 %v1131
    %v1223 = vunpack.c.h.b16 %v1131
    %v1224 = vunpack.c.l.b16 %v1132
    %v1225 = vunpack.c.h.b16 %v1132
    %v1226 = vunpack.c.l.b16 %v1133
    %v1227 = vunpack.c.h.b16 %v1133
    %v1228 = vunpack.c.l.b16 %v1134
    %v1229 = vunpack.c.h.b16 %v1134
    %v1230 = vunpack.c.l.b16 %v1135
    %v1231 = vunpack.c.h.b16 %v1135
    %v1232 = vunpack.c.l.b16 %v1136
    %v1233 = vunpack.c.h.b16 %v1136
    %v1234 = vunpack.c.l.b16 %v1137
    %v1235 = vunpack.c.h.b16 %v1137
    %v1236 = vunpack.c.l.b16 %v1138
    %v1237 = vunpack.c.h.b16 %v1138
    %v1238 = vunpack.c.l.b16 %v1139
    %v1239 = vunpack.c.h.b16 %v1139
    %v1240 = vunpack.c.l.b16 %v1140
    %v1241 = vunpack.c.h.b16 %v1140
    %v1242 = vunpack.c.l.b16 %v1141
    %v1243 = vunpack.c.h.b16 %v1141
    %v1244 = vpack.c.b16 %v1182, %v1180
    %v1245 = vpack.c.b16 %v1183, %v1181
    %v1246 = vpack.c.b16 %v1186, %v1184
    %v1247 = vpack.c.b16 %v1187, %v1185
    %v1248 = vpack.c.b16 %v1190, %v1188
    %v1249 = vpack.c.b16 %v1191, %v1189
    %v1250 = vpack.c.b16 %v1194, %v1192
    %v1251 = vpack.c.b16 %v1195, %v1193
    %v1252 = vpack.c.b16 %v1198, %v1196
    %v1253 = vpack.c.b16 %v1199, %v1197
    %v1254 = vpack.c.b16 %v1202, %v1200
    %v1255 = vpack.c.b16 %v1203, %v1201
    %v1256 = vpack.c.b16 %v1206, %v1204
    %v1257 = vpack.c.b16 %v1207, %v1205
    %v1258 = vpack.c.b16 %v1210, %v1208
    %v1259 = vpack.c.b16 %v1211, %v1209
    %v1260 = vpack.c.b16 %v1214, %v1212
    %v1261 = vpack.c.b16 %v1215, %v1213
    %v1262 = vpack.c.b16 %v1218, %v1216
    %v1263 = vpack.c.b16 %v1219, %v1217
    %v1264 = vpack.c.b16 %v1222, %v1220
    %v1265 = vpack.c.b16 %v1223, %v1221
    %v1266 = vpack.c.b16 %v1226, %v1224
    %v1267 = vpack.c.b16 %v1227, %v1225
    %v1268 = vpack.c.b16 %v1230, %v1228
    %v1269 = vpack.c.b16 %v1231, %v1229
    %v1270 = vpack.c.b16 %v1234, %v1232
    %v1271 = vpack.c.b16 %v1235, %v1233
    %v1272 = vpack.c.b16 %v1238, %v1236
    %v1273 = vpack.c.b16 %v1239, %v1237
    %v1274 = vpack.c.b16 %v1242, %v1240
    %v1275 = vpack.c.b16 %v1243, %v1241
    %1308 = vmatpush.bf16.msra.mxu0 %v1258
    %1309 = vmatpush.bf16.msra.mxu0 %v1256
    %1310 = vmatpush.bf16.msra.mxu0 %v1254
    %1311 = vmatpush.bf16.msra.mxu0 %v1252
    %1312 = vmatpush.bf16.msra.mxu0 %v1250
    %1313 = vmatpush.bf16.msra.mxu0 %v1248
    %1314 = vmatpush.bf16.msra.mxu0 %v1246
    %1315 = vmatpush.bf16.msra.mxu0 %v1244
    %1316 = vmatmul.bf16.gmra.mxu0 %v1106
    %v1317 = vpop.f32.mrf.mxu0
    %v1318 = vadd.f32 %v1144, %v1317
    %v1319 = vpop.f32.mrf.mxu0
    %v1320 = vadd.f32 %v1144, %v1319
    %1321 = vmatmul.bf16.gmra.mxu0 %v1107
    %v1322 = vpop.f32.mrf.mxu0
    %v1323 = vadd.f32 %v1144, %v1322
    %v1324 = vpop.f32.mrf.mxu0
    %v1325 = vadd.f32 %v1144, %v1324
    %1326 = vdwg.mxu0
    %1327 = vmatpush.bf16.msra.mxu0 %v1274
    %1328 = vmatpush.bf16.msra.mxu0 %v1272
    %1329 = vmatpush.bf16.msra.mxu0 %v1270
    %1330 = vmatpush.bf16.msra.mxu0 %v1268
    %1331 = vmatpush.bf16.msra.mxu0 %v1266
    %1332 = vmatpush.bf16.msra.mxu0 %v1264
    %1333 = vmatpush.bf16.msra.mxu0 %v1262
    %1334 = vmatpush.bf16.msra.mxu0 %v1260
    %1335 = vmatmul.bf16.gmra.mxu0 %v105
    %v1336 = vpop.f32.mrf.mxu0
    %v1337 = vadd.f32 %v1318, %v1336
    %v1338 = vpop.f32.mrf.mxu0
    %v1339 = vadd.f32 %v1320, %v1338
    %1340 = vmatmul.bf16.gmra.mxu0 %v106
    %v1341 = vpop.f32.mrf.mxu0
    %v1342 = vadd.f32 %v1323, %v1341
    %v1343 = vpop.f32.mrf.mxu0
    %v1344 = vadd.f32 %v1325, %v1343
    %1345 = vdwg.mxu0
    %1346 = vmatpush.bf16.msra.mxu0 %v1259
    %1347 = vmatpush.bf16.msra.mxu0 %v1257
    %1348 = vmatpush.bf16.msra.mxu0 %v1255
    %1349 = vmatpush.bf16.msra.mxu0 %v1253
    %1350 = vmatpush.bf16.msra.mxu0 %v1251
    %1351 = vmatpush.bf16.msra.mxu0 %v1249
    %1352 = vmatpush.bf16.msra.mxu0 %v1247
    %1353 = vmatpush.bf16.msra.mxu0 %v1245
    %1354 = vmatmul.bf16.gmra.mxu0 %v1106
    %v1355 = vpop.f32.mrf.mxu0
    %v1356 = vadd.f32 %v1145, %v1355
    %v1357 = vpop.f32.mrf.mxu0
    %v1358 = vadd.f32 %v1145, %v1357
    %1359 = vmatmul.bf16.gmra.mxu0 %v1107
    %v1360 = vpop.f32.mrf.mxu0
    %v1361 = vadd.f32 %v1145, %v1360
    %v1362 = vpop.f32.mrf.mxu0
    %v1363 = vadd.f32 %v1145, %v1362
    %1364 = vdwg.mxu0
    %1365 = vmatpush.bf16.msra.mxu0 %v1275
    %1366 = vmatpush.bf16.msra.mxu0 %v1273
    %1367 = vmatpush.bf16.msra.mxu0 %v1271
    %1368 = vmatpush.bf16.msra.mxu0 %v1269
    %1369 = vmatpush.bf16.msra.mxu0 %v1267
    %1370 = vmatpush.bf16.msra.mxu0 %v1265
    %1371 = vmatpush.bf16.msra.mxu0 %v1263
    %1372 = vmatpush.bf16.msra.mxu0 %v1261
    %1373 = vmatmul.bf16.gmra.mxu0 %v105
    %v1374 = vpop.f32.mrf.mxu0
    %v1375 = vadd.f32 %v1356, %v1374
    %v1376 = vpop.f32.mrf.mxu0
    %v1377 = vadd.f32 %v1358, %v1376
    %1378 = vmatmul.bf16.gmra.mxu0 %v106
    %v1379 = vpop.f32.mrf.mxu0
    %v1380 = vadd.f32 %v1361, %v1379
    %v1381 = vpop.f32.mrf.mxu0
    %v1382 = vadd.f32 %v1363, %v1381
    %1383 = vdwg.mxu0
    %1384 = vst [vmem:[%s12] sm:$0xff] %v1337
    %1385 = vst [vmem:[%s12 + $0x8] sm:$0xff] %v1375
    %1386 = vst [vmem:[%s12 + $0x10] sm:$0xff] %v1339
    %1387 = vst [vmem:[%s12 + $0x18] sm:$0xff] %v1377
    %1388 = vst [vmem:[%s12 + $0x20] sm:$0xff] %v1342
    %1389 = vst [vmem:[%s12 + $0x28] sm:$0xff] %v1380
    %1390 = vst [vmem:[%s12 + $0x30] sm:$0xff] %v1344
    %1391 = vst [vmem:[%s12 + $0x38] sm:$0xff] %v1382
    // Predicated region
    $region58: #{fwd.1} parent=1 // pred_check
      _
    $region59: #{fwd.1} parent=1 // pred_check_branch
      %1393 = sbr.rel (0) target = $region61
    $region60: #{fwd.1} parent=1 // pred_region
      _
    $region61: #{fwd.1} parent=1 // pred_fallthru
      _
    // Predicated region
    $region62: #{fwd.1} parent=1 // pred_check
      _
    $region63: #{fwd.1} parent=1 // pred_check_branch
      %1395 = sbr.rel (0) target = $region65
    $region64: #{fwd.1} parent=1 // pred_region
      _
    $region65: #{fwd.1} parent=1 // pred_fallthru
      _
    %1396 = vsyncpa [#allocation3], 1
    %1397 = vsyncpa [#allocation5], 1

</llo_original>
